<compile_context>
chip_gen: v5e
topology: v5e:2x2
jax: 0.10.0
libtpu: 0.0.40
codegen_flags: <defaults>
</compile_context>

<pallas_src>
import functools
import math

import jax
import jax.numpy as jnp
import numpy as np
from jax.experimental import pallas as pl
from jax.experimental.pallas import tpu as pltpu

EPS = 1e-5  # torch.nn.LayerNorm default eps

LAYER_PARAM_KEYS = (
    "g1", "be1",                 # LayerNorm before MHA
    "wqkv", "bqkv", "wo", "bo",  # MultiHeadedAttention (fused QKV projection)
    "g2", "be2",                 # LayerNorm before FFN
    "w1", "bb1", "w2", "bb2",    # PositionwiseFeedForward
)
WEIGHT_KEYS = frozenset({"wqkv", "wo", "w1", "w2"})


def _layernorm(x, g, b):
    mu = jnp.mean(x, axis=-1, keepdims=True)
    var = jnp.mean((x - mu) ** 2, axis=-1, keepdims=True)
    return (x - mu) * jax.lax.rsqrt(var + EPS) * g + b


def fused_encoder_kernel(x_ref,
                         g1_ref, be1_ref, wqkv_ref, bqkv_ref, wo_ref, bo_ref,
                         g2_ref, be2_ref, w1_ref, bb1_ref, w2_ref, bb2_ref,
                         ga_ref, ba_ref,
                         o_ref,
                         x_vmem, qkv_vmem, ctx_vmem,
                         *, heads, mm_dtype, resident_weights):
    """One (batch-tile, layer) grid step of the fused encoder."""
    layer = pl.program_id(1)
    n_layers = pl.num_programs(1)
    bt, seq, d_model = x_ref.shape
    rows = bt * seq
    dk = d_model // heads
    scale = 1.0 / math.sqrt(dk)

    def P(ref):
        # Resident mode: whole stacked (NB, ...) param lives in VMEM, index the
        # layer dynamically.  Streaming mode: per-layer block, index 0.
        return ref[layer] if resident_weights else ref[0]

    # First layer of this batch tile: pull the activation into the resident
    # f32 VMEM scratch (it stays there across all layers).
    @pl.when(layer == 0)
    def _():
        x_vmem[...] = x_ref[...].reshape(rows, d_model).astype(jnp.float32)

    x = x_vmem[...]                                    # (Bt*L, D) float32

    # ---------------- self-attention sublayer (pre-norm, residual) ----------
    xn = _layernorm(x, P(g1_ref), P(be1_ref)).astype(mm_dtype)
    qkv = jnp.dot(xn, P(wqkv_ref), preferred_element_type=jnp.float32) + P(bqkv_ref)
    qkv_vmem[...] = qkv.reshape(bt, seq, 3 * d_model).astype(mm_dtype)

    # Per-head attention; q/k/v windows are read directly from the bf16 qkv
    # scratch (lane-dense for the default dk=128).  Mask is all-ones here
    # (ilens=None, causal_mode='None'), so plain softmax is exact.
    # TODO(synk): flash-style KV tiling for long L; 128-lane head pairing for
    # dk=64 configs.
    for h in range(heads):
        off = h * dk
        qh = qkv_vmem[:, :, off:off + dk]
        kh = qkv_vmem[:, :, d_model + off:d_model + off + dk]
        vh = qkv_vmem[:, :, 2 * d_model + off:2 * d_model + off + dk]
        s = jnp.einsum("bqd,bkd->bqk", qh, kh,
                       preferred_element_type=jnp.float32) * scale
        m = jnp.max(s, axis=-1, keepdims=True)
        e = jnp.exp(s - m)
        # Deferred normalization: PV with un-normalized e, then scale the
        # (bt, L, dk) context by an EUP approximate reciprocal of the row sum.
        inv = pl.reciprocal(jnp.sum(e, axis=-1, keepdims=True), approx=True)
        ctx = jnp.einsum("bqk,bkd->bqd", e.astype(mm_dtype), vh,
                         preferred_element_type=jnp.float32) * inv
        ctx_vmem[:, :, off:off + dk] = ctx.astype(mm_dtype)

    att = jnp.dot(ctx_vmem[...].reshape(rows, d_model), P(wo_ref),
                  preferred_element_type=jnp.float32) + P(bo_ref)
    x = x + att                                        # dropout_rate = 0.0

    # ---------------- position-wise feed-forward sublayer -------------------
    xn2 = _layernorm(x, P(g2_ref), P(be2_ref)).astype(mm_dtype)
    h1 = jnp.maximum(
        jnp.dot(xn2, P(w1_ref), preferred_element_type=jnp.float32) + P(bb1_ref),
        0.0)
    ff = jnp.dot(h1.astype(mm_dtype), P(w2_ref),
                 preferred_element_type=jnp.float32) + P(bb2_ref)
    x = x + ff

    x_vmem[...] = x                                    # carry to next layer

    # Last layer: fused after_norm (normalize_before=True) + output store.
    @pl.when(layer == n_layers - 1)
    def _():
        y = _layernorm(x, ga_ref[...], ba_ref[...])
        o_ref[...] = y.reshape(bt, seq, d_model).astype(o_ref.dtype)


# ---------------------------------------------------------------------------
# Wrapper helpers
# ---------------------------------------------------------------------------
def _vmem_capacity_bytes():
    try:
        info = pltpu.get_tpu_info()
        cap = getattr(info, "vmem_capacity_bytes", None)
        if cap:
            return int(cap)
    except Exception:
        pass
    return 64 * 1024 * 1024   # conservative fallback (v7x per-TC VMEM)


def _tile_vmem_bytes(bt, seq, d_model, mm_itemsize, weight_bytes):
    """Rough per-grid-step VMEM footprint for a batch tile of size bt."""
    rows = bt * seq
    b = rows * d_model * 4                      # resident f32 activation scratch
    b += rows * 3 * d_model * mm_itemsize       # qkv scratch (bf16)
    b += rows * d_model * mm_itemsize           # attention-context scratch (bf16)
    b += 4 * rows * d_model * 4                 # double-buffered input + output blocks
    b += 3 * bt * seq * seq * 4                 # one head's f32 scores / exp temps
    b += weight_bytes                           # weight blocks (streamed or resident)
    return b


def _pick_batch_tile(batch, seq, d_model, vmem_limit, mm_itemsize, per_layer_w):
    """Largest divisor of `batch` whose tile fits the VMEM budget, but keep
    >= 2 batch tiles whenever possible (megacore / v7x dual-TensorCore)."""
    divisors = [d for d in range(1, batch + 1) if batch % d == 0]
    best = 1
    for d in divisors:
        if _tile_vmem_bytes(d, seq, d_model, mm_itemsize,
                            2 * per_layer_w) <= 0.6 * vmem_limit:
            best = d
    if batch // best < 2:
        smaller = [d for d in divisors if d < best]
        if smaller:
            best = smaller[-1]
    return best


def _stack_layer_params(layer_params, mm_dtype):
    """Stack per-layer params along a leading layer axis.

    Q/K/V are fused: wqkv (NB, D, 3D), bqkv (NB, 1, 3D).
    Weights -> mm_dtype (bf16 halves DMA); biases / LN params -> (NB, 1, Dout) f32.
    """
    fused = []
    for p in layer_params:
        q = dict(p)
        q["wqkv"] = jnp.concatenate([p["wq"], p["wk"], p["wv"]], axis=1)
        q["bqkv"] = jnp.concatenate([p["bq"], p["bk"], p["bv"]], axis=0)
        fused.append(q)
    stacked = {}
    for key in LAYER_PARAM_KEYS:
        arr = jnp.stack([p[key] for p in fused], axis=0)
        if key in WEIGHT_KEYS:
            arr = arr.astype(mm_dtype)
        else:
            arr = arr[:, None, :].astype(jnp.float32)
        stacked[key] = arr
    return stacked


def _layer_param_spec(arr, resident):
    nb, d0, d1 = arr.shape
    if resident:
        # Whole stacked array resident in VMEM; constant index map -> DMA'd once.
        return pl.BlockSpec((nb, d0, d1), lambda b, l: (0, 0, 0))
    return pl.BlockSpec((1, d0, d1), lambda b, l: (l, 0, 0))


def transformer_encoder_forward(xs_pad, layer_params, after_g, after_b, heads,
                                *, block_batch=None, mm_dtype=jnp.bfloat16):
    """xs_pad: (B, C, L) -> (B, C, L), mirroring the PyTorch forward."""
    x = jnp.transpose(xs_pad, (0, 2, 1)).astype(jnp.float32)   # (B, L, D)
    batch, seq, d_model = x.shape
    num_blocks = len(layer_params)
    assert d_model % heads == 0
    ff_dim = layer_params[0]["w1"].shape[1]

    mm_itemsize = jnp.dtype(mm_dtype).itemsize
    per_layer_w = (4 * d_model * d_model + 2 * d_model * ff_dim) * mm_itemsize
    total_w = num_blocks * per_layer_w

    vmem_limit = int(0.85 * _vmem_capacity_bytes())

    bt = (block_batch if block_batch is not None else
          _pick_batch_tile(batch, seq, d_model, vmem_limit, mm_itemsize,
                           per_layer_w))
    assert batch % bt == 0

    # Resident weights when the whole stacked set (double-buffered, worst case)
    # plus the tile state fits comfortably; otherwise stream per layer.
    resident = (_tile_vmem_bytes(bt, seq, d_model, mm_itemsize, 2 * total_w)
                <= 0.7 * vmem_limit)

    stacked = _stack_layer_params(layer_params, mm_dtype)
    ga = jnp.asarray(after_g, jnp.float32).reshape(1, d_model)
    ba = jnp.asarray(after_b, jnp.float32).reshape(1, d_model)

    in_specs = [pl.BlockSpec((bt, seq, d_model), lambda b, l: (b, 0, 0))]
    in_specs += [_layer_param_spec(stacked[k], resident) for k in LAYER_PARAM_KEYS]
    in_specs += [pl.BlockSpec((1, d_model), lambda b, l: (0, 0))] * 2

    kernel = functools.partial(fused_encoder_kernel, heads=heads,
                               mm_dtype=mm_dtype, resident_weights=resident)
    out = pl.pallas_call(
        kernel,
        out_shape=jax.ShapeDtypeStruct((batch, seq, d_model), x.dtype),
        grid_spec=pltpu.PrefetchScalarGridSpec(
            num_scalar_prefetch=0,
            grid=(batch // bt, num_blocks),         # layer (carry) axis innermost
            in_specs=in_specs,
            out_specs=pl.BlockSpec((bt, seq, d_model), lambda b, l: (b, 0, 0)),
            scratch_shapes=[
                pltpu.VMEM((bt * seq, d_model), jnp.float32),     # resident activation
                pltpu.VMEM((bt, seq, 3 * d_model), mm_dtype),     # fused qkv (bf16)
                pltpu.VMEM((bt, seq, d_model), mm_dtype),         # attention context
            ],
        ),
        compiler_params=pltpu.CompilerParams(
            dimension_semantics=("parallel", "arbitrary"),
            vmem_limit_bytes=vmem_limit,
        ),
    )(x, *[stacked[k] for k in LAYER_PARAM_KEYS], ga, ba)
    # skip=False -> no residual add of the encoder input
    return jnp.transpose(out, (0, 2, 1))             # (B, D, L)


# ---------------------------------------------------------------------------
# Pure-JAX references.
#   mm_dtype=None          -> f32 module semantics.
#   mm_dtype=jnp.bfloat16  -> mirrors the kernel's matmul-operand casting and
#                             deferred softmax normalization (exact division).
# ---------------------------------------------------------------------------
def _ref_forward(xs_pad, layer_params, after_g, after_b, heads, mm_dtype=None):
    cast = (lambda a: a.astype(mm_dtype)) if mm_dtype is not None else (lambda a: a)
    x = jnp.transpose(xs_pad, (0, 2, 1)).astype(jnp.float32)
    batch, seq, d_model = x.shape
    dk = d_model // heads
    scale = 1.0 / math.sqrt(dk)
    xf = x.reshape(batch * seq, d_model)
    for p in layer_params:
        xn = cast(_layernorm(xf, p["g1"], p["be1"]))
        q = jnp.dot(xn, cast(p["wq"]), preferred_element_type=jnp.float32) + p["bq"]
        k = jnp.dot(xn, cast(p["wk"]), preferred_element_type=jnp.float32) + p["bk"]
        v = jnp.dot(xn, cast(p["wv"]), preferred_element_type=jnp.float32) + p["bv"]
        q3 = q.reshape(batch, seq, d_model)
        k3 = k.reshape(batch, seq, d_model)
        v3 = v.reshape(batch, seq, d_model)
        ctx_heads = []
        for h in range(heads):
            sl = slice(h * dk, (h + 1) * dk)
            s = jnp.einsum("bqd,bkd->bqk", cast(q3[:, :, sl]), cast(k3[:, :, sl]),
                           preferred_element_type=jnp.float32) * scale
            m = jnp.max(s, axis=-1, keepdims=True)
            e = jnp.exp(s - m)
            ctx_h = jnp.einsum("bqk,bkd->bqd", cast(e), cast(v3[:, :, sl]),
                               preferred_element_type=jnp.float32)
            ctx_heads.append(ctx_h / jnp.sum(e, axis=-1, keepdims=True))
        ctx = jnp.concatenate(ctx_heads, axis=-1).reshape(batch * seq, d_model)
        att = jnp.dot(cast(ctx), cast(p["wo"]),
                      preferred_element_type=jnp.float32) + p["bo"]
        xf = xf + att
        xn2 = cast(_layernorm(xf, p["g2"], p["be2"]))
        h1 = jnp.maximum(
            jnp.dot(xn2, cast(p["w1"]), preferred_element_type=jnp.float32) + p["bb1"],
            0.0)
        ff = jnp.dot(cast(h1), cast(p["w2"]),
                     preferred_element_type=jnp.float32) + p["bb2"]
        xf = xf + ff
    y = _layernorm(xf, after_g, after_b)
    return jnp.transpose(y.reshape(batch, seq, d_model), (0, 2, 1))


if __name__ == "__main__":
    # Small, module-consistent shapes: input_size = output_size = 32,
    # attention_heads = 4, linear_units = 64, num_blocks = 2, seq len L = 8.
    B, D, L = 2, 32, 8
    HEADS, FF, NUM_BLOCKS = 4, 64, 2

    root = jax.random.PRNGKey(0)
    key_x, key_p = jax.random.split(root)
    xs_pad = jax.random.normal(key_x, (B, D, L), jnp.float32)   # (B, C, L)

    def _w(k, shape, scale=0.1):
        return scale * jax.random.normal(k, shape, jnp.float32)

    layer_params = []
    for i in range(NUM_BLOCKS):
        ks = jax.random.split(jax.random.fold_in(key_p, i), 12)
        layer_params.append({
            "g1": jnp.ones((D,), jnp.float32),
            "be1": jnp.zeros((D,), jnp.float32),
            "wq": _w(ks[0], (D, D)),  "bq": _w(ks[1], (D,), 0.02),
            "wk": _w(ks[2], (D, D)),  "bk": _w(ks[3], (D,), 0.02),
            "wv": _w(ks[4], (D, D)),  "bv": _w(ks[5], (D,), 0.02),
            "wo": _w(ks[6], (D, D)),  "bo": _w(ks[7], (D,), 0.02),
            "g2": jnp.ones((D,), jnp.float32),
            "be2": jnp.zeros((D,), jnp.float32),
            "w1": _w(ks[8], (D, FF)), "bb1": _w(ks[9], (FF,), 0.02),
            "w2": _w(ks[10], (FF, D)), "bb2": _w(ks[11], (D,), 0.02),
        })
    after_g = jnp.ones((D,), jnp.float32)
    after_b = jnp.zeros((D,), jnp.float32)

    out = transformer_encoder_forward(xs_pad, layer_params, after_g, after_b,
                                      HEADS)
    out = jax.block_until_ready(out)
    assert out.shape == (B, D, L)

    # (1) Matched reference: same bf16 matmul-operand casts and deferred
    #     softmax normalization; only the approximate reciprocal differs.
    ref_matched = jax.block_until_ready(
        _ref_forward(xs_pad, layer_params, after_g, after_b, HEADS,
                     mm_dtype=jnp.bfloat16))
    np.testing.assert_allclose(np.asarray(out), np.asarray(ref_matched),
                               rtol=2e-2, atol=2e-2)

    # (2) Module-semantics check against the full-f32 reference.
    ref_f32 = jax.block_until_ready(
        _ref_forward(xs_pad, layer_params, after_g, after_b, HEADS,
                     mm_dtype=None))
    np.testing.assert_allclose(np.asarray(out), np.asarray(ref_f32),
                               rtol=6e-2, atol=6e-2)

    print("KERNEL_OK")
</pallas_src>

<mosaic_0001>
module attributes {stable_mosaic.version = 11 : i64} {
  func.func @fused_encoder_kernel(%arg0: i32, %arg1: i32, %arg2: memref<1x8x32xf32, #tpu.memory_space<vmem>>, %arg3: memref<2x1x32xf32, #tpu.memory_space<vmem>>, %arg4: memref<2x1x32xf32, #tpu.memory_space<vmem>>, %arg5: memref<2x32x96xbf16, #tpu.memory_space<vmem>>, %arg6: memref<2x1x96xf32, #tpu.memory_space<vmem>>, %arg7: memref<2x32x32xbf16, #tpu.memory_space<vmem>>, %arg8: memref<2x1x32xf32, #tpu.memory_space<vmem>>, %arg9: memref<2x1x32xf32, #tpu.memory_space<vmem>>, %arg10: memref<2x1x32xf32, #tpu.memory_space<vmem>>, %arg11: memref<2x32x64xbf16, #tpu.memory_space<vmem>>, %arg12: memref<2x1x64xf32, #tpu.memory_space<vmem>>, %arg13: memref<2x64x32xbf16, #tpu.memory_space<vmem>>, %arg14: memref<2x1x32xf32, #tpu.memory_space<vmem>>, %arg15: memref<1x32xf32, #tpu.memory_space<vmem>>, %arg16: memref<1x32xf32, #tpu.memory_space<vmem>>, %arg17: memref<1x8x32xf32, #tpu.memory_space<vmem>>, %arg18: memref<8x32xf32, #tpu.memory_space<vmem>>, %arg19: memref<1x8x96xbf16, #tpu.memory_space<vmem>>, %arg20: memref<1x8x32xbf16, #tpu.memory_space<vmem>>) attributes {dimension_semantics = [#tpu.dimension_semantics<parallel>, #tpu.dimension_semantics<arbitrary>], iteration_bounds = array<i64: 2, 2>, scalar_prefetch = 0 : i64, scratch_operands = 3 : i64, tpu.core_type = #tpu.core_type<tc>, window_params = [{transform_indices = @transform_0, window_bounds = array<i64: 1, 8, 32>}, {pipeline_mode = #tpu.pipeline_mode<synchronous>, transform_indices = @transform_1, window_bounds = array<i64: 2, 1, 32>}, {pipeline_mode = #tpu.pipeline_mode<synchronous>, transform_indices = @transform_2, window_bounds = array<i64: 2, 1, 32>}, {pipeline_mode = #tpu.pipeline_mode<synchronous>, transform_indices = @transform_3, window_bounds = array<i64: 2, 32, 96>}, {pipeline_mode = #tpu.pipeline_mode<synchronous>, transform_indices = @transform_4, window_bounds = array<i64: 2, 1, 96>}, {pipeline_mode = #tpu.pipeline_mode<synchronous>, transform_indices = @transform_5, window_bounds = array<i64: 2, 32, 32>}, {pipeline_mode = #tpu.pipeline_mode<synchronous>, transform_indices = @transform_6, window_bounds = array<i64: 2, 1, 32>}, {pipeline_mode = #tpu.pipeline_mode<synchronous>, transform_indices = @transform_7, window_bounds = array<i64: 2, 1, 32>}, {pipeline_mode = #tpu.pipeline_mode<synchronous>, transform_indices = @transform_8, window_bounds = array<i64: 2, 1, 32>}, {pipeline_mode = #tpu.pipeline_mode<synchronous>, transform_indices = @transform_9, window_bounds = array<i64: 2, 32, 64>}, {pipeline_mode = #tpu.pipeline_mode<synchronous>, transform_indices = @transform_10, window_bounds = array<i64: 2, 1, 64>}, {pipeline_mode = #tpu.pipeline_mode<synchronous>, transform_indices = @transform_11, window_bounds = array<i64: 2, 64, 32>}, {pipeline_mode = #tpu.pipeline_mode<synchronous>, transform_indices = @transform_12, window_bounds = array<i64: 2, 1, 32>}, {pipeline_mode = #tpu.pipeline_mode<synchronous>, transform_indices = @transform_13, window_bounds = array<i64: 1, 32>}, {pipeline_mode = #tpu.pipeline_mode<synchronous>, transform_indices = @transform_14, window_bounds = array<i64: 1, 32>}, {transform_indices = @transform_15, window_bounds = array<i64: 1, 8, 32>}]} {
    %c0_i32 = arith.constant 0 : i32
    %0 = arith.cmpi eq, %arg1, %c0_i32 : i32
    %1 = arith.extui %0 : i1 to i32
    %c0_i32_0 = arith.constant 0 : i32
    %2 = arith.cmpi ne, %1, %c0_i32_0 : i32
    scf.if %2 {
      %c0_106 = arith.constant 0 : index
      %c0_107 = arith.constant 0 : index
      %c0_108 = arith.constant 0 : index
      %192 = vector.load %arg2[%c0_106, %c0_107, %c0_108] : memref<1x8x32xf32, #tpu.memory_space<vmem>>, vector<1x8x32xf32>
      %193 = vector.shape_cast %192 : vector<1x8x32xf32> to vector<8x32xf32>
      %c0_109 = arith.constant 0 : index
      %c0_110 = arith.constant 0 : index
      %194 = vector.load %arg18[%c0_109, %c0_110] : memref<8x32xf32, #tpu.memory_space<vmem>>, vector<8x32xf32>
      tpu.vector_store %arg18[%c0_109, %c0_110], %193 {strides = array<i32>} : memref<8x32xf32, #tpu.memory_space<vmem>>, vector<8x32xf32>,
    } else {
    }
    %c0 = arith.constant 0 : index
    %c0_1 = arith.constant 0 : index
    %3 = vector.load %arg18[%c0, %c0_1] : memref<8x32xf32, #tpu.memory_space<vmem>>, vector<8x32xf32>
    %4 = arith.index_cast %arg1 : i32 to index
    %c0_2 = arith.constant 0 : index
    %c0_3 = arith.constant 0 : index
    %5 = vector.load %arg3[%4, %c0_2, %c0_3] : memref<2x1x32xf32, #tpu.memory_space<vmem>>, vector<1x1x32xf32>
    %6 = vector.shape_cast %5 : vector<1x1x32xf32> to vector<1x32xf32>
    %7 = arith.index_cast %arg1 : i32 to index
    %c0_4 = arith.constant 0 : index
    %c0_5 = arith.constant 0 : index
    %8 = vector.load %arg4[%7, %c0_4, %c0_5] : memref<2x1x32xf32, #tpu.memory_space<vmem>>, vector<1x1x32xf32>
    %9 = vector.shape_cast %8 : vector<1x1x32xf32> to vector<1x32xf32>
    %cst = arith.constant dense<0.000000e+00> : vector<8xf32>
    %10 = vector.multi_reduction <add>, %3, %cst [1] : vector<8x32xf32> to vector<8xf32>
    %11 = vector.shape_cast %10 : vector<8xf32> to vector<8x1xf32>
    %cst_6 = arith.constant 3.200000e+01 : f32
    %12 = vector.broadcast %cst_6 : f32 to vector<8x1xf32>
    %13 = arith.divf %11, %12 : vector<8x1xf32>
    %14 = vector.broadcast %13 : vector<8x1xf32> to vector<8x32xf32>
    %15 = arith.subf %3, %14 : vector<8x32xf32>
    %16 = arith.mulf %15, %15 : vector<8x32xf32>
    %cst_7 = arith.constant dense<0.000000e+00> : vector<8xf32>
    %17 = vector.multi_reduction <add>, %16, %cst_7 [1] : vector<8x32xf32> to vector<8xf32>
    %18 = vector.shape_cast %17 : vector<8xf32> to vector<8x1xf32>
    %cst_8 = arith.constant 3.200000e+01 : f32
    %19 = vector.broadcast %cst_8 : f32 to vector<8x1xf32>
    %20 = arith.divf %18, %19 : vector<8x1xf32>
    %21 = vector.broadcast %13 : vector<8x1xf32> to vector<8x32xf32>
    %22 = arith.subf %3, %21 : vector<8x32xf32>
    %cst_9 = arith.constant 9.99999974E-6 : f32
    %23 = vector.broadcast %cst_9 : f32 to vector<8x1xf32>
    %24 = arith.addf %20, %23 : vector<8x1xf32>
    %25 = math.rsqrt %24 : vector<8x1xf32>
    %26 = vector.broadcast %25 : vector<8x1xf32> to vector<8x32xf32>
    %27 = arith.mulf %22, %26 : vector<8x32xf32>
    %28 = vector.broadcast %6 : vector<1x32xf32> to vector<8x32xf32>
    %29 = arith.mulf %27, %28 : vector<8x32xf32>
    %30 = vector.broadcast %9 : vector<1x32xf32> to vector<8x32xf32>
    %31 = arith.addf %29, %30 : vector<8x32xf32>
    %32 = arith.truncf %31 : vector<8x32xf32> to vector<8x32xbf16>
    %33 = arith.index_cast %arg1 : i32 to index
    %c0_10 = arith.constant 0 : index
    %c0_11 = arith.constant 0 : index
    %34 = vector.load %arg5[%33, %c0_10, %c0_11] : memref<2x32x96xbf16, #tpu.memory_space<vmem>>, vector<1x32x96xbf16>
    %35 = vector.shape_cast %34 : vector<1x32x96xbf16> to vector<32x96xbf16>
    %cst_12 = arith.constant dense<0.000000e+00> : vector<8x96xf32>
    %36 = tpu.matmul %32, %35, %cst_12 {dimension_numbers = #tpu.dot_dimension_numbers<[1], [0], [0], [1], [0, 0, 1, 1], [], []>} : vector<8x32xbf16>, vector<32x96xbf16>, vector<8x96xf32> -> vector<8x96xf32>
    %37 = arith.index_cast %arg1 : i32 to index
    %c0_13 = arith.constant 0 : index
    %c0_14 = arith.constant 0 : index
    %38 = vector.load %arg6[%37, %c0_13, %c0_14] : memref<2x1x96xf32, #tpu.memory_space<vmem>>, vector<1x1x96xf32>
    %39 = vector.shape_cast %38 : vector<1x1x96xf32> to vector<1x96xf32>
    %40 = vector.broadcast %39 : vector<1x96xf32> to vector<8x96xf32>
    %41 = arith.addf %36, %40 : vector<8x96xf32>
    %42 = vector.shape_cast %41 : vector<8x96xf32> to vector<1x8x96xf32>
    %43 = arith.truncf %42 : vector<1x8x96xf32> to vector<1x8x96xbf16>
    %c0_15 = arith.constant 0 : index
    %c0_16 = arith.constant 0 : index
    %c0_17 = arith.constant 0 : index
    %44 = vector.load %arg19[%c0_15, %c0_16, %c0_17] : memref<1x8x96xbf16, #tpu.memory_space<vmem>>, vector<1x8x96xbf16>
    tpu.vector_store %arg19[%c0_15, %c0_16, %c0_17], %43 {strides = array<i32>} : memref<1x8x96xbf16, #tpu.memory_space<vmem>>, vector<1x8x96xbf16>,
    %c0_18 = arith.constant 0 : index
    %c0_19 = arith.constant 0 : index
    %c0_20 = arith.constant 0 : index
    %45 = vector.load %arg19[%c0_18, %c0_19, %c0_20] : memref<1x8x96xbf16, #tpu.memory_space<vmem>>, vector<1x8x8xbf16>
    %c0_21 = arith.constant 0 : index
    %c0_22 = arith.constant 0 : index
    %c32 = arith.constant 32 : index
    %46 = vector.load %arg19[%c0_21, %c0_22, %c32] : memref<1x8x96xbf16, #tpu.memory_space<vmem>>, vector<1x8x8xbf16>
    %c0_23 = arith.constant 0 : index
    %c0_24 = arith.constant 0 : index
    %c64 = arith.constant 64 : index
    %47 = vector.load %arg19[%c0_23, %c0_24, %c64] : memref<1x8x96xbf16, #tpu.memory_space<vmem>>, vector<1x8x8xbf16>
    "tpu.trace_start"() <{level = 10 : i32, message = "bqd,bkd->bqk"}> : () -> ()
    %cst_25 = arith.constant dense<0.000000e+00> : vector<1x8x8xf32>
    %48 = tpu.matmul %45, %46, %cst_25 {dimension_numbers = #tpu.dot_dimension_numbers<[2], [2], [1], [1], [0, 0, 0, 1, 1, 1], [0], [0]>} : vector<1x8x8xbf16>, vector<1x8x8xbf16>, vector<1x8x8xf32> -> vector<1x8x8xf32>
    "tpu.trace_stop"() : () -> ()
    %cst_26 = arith.constant 0.353553385 : f32
    %49 = vector.broadcast %cst_26 : f32 to vector<1x8x8xf32>
    %50 = arith.mulf %48, %49 : vector<1x8x8xf32>
    %cst_27 = arith.constant dense<0xFF800000> : vector<1x8xf32>
    %51 = vector.multi_reduction <maximumf>, %50, %cst_27 [2] : vector<1x8x8xf32> to vector<1x8xf32>
    %52 = vector.shape_cast %51 : vector<1x8xf32> to vector<1x8x1xf32>
    %53 = vector.broadcast %52 : vector<1x8x1xf32> to vector<1x8x8xf32>
    %54 = arith.subf %50, %53 : vector<1x8x8xf32>
    %55 = math.exp %54 : vector<1x8x8xf32>
    %cst_28 = arith.constant dense<0.000000e+00> : vector<1x8xf32>
    %56 = vector.multi_reduction <add>, %55, %cst_28 [2] : vector<1x8x8xf32> to vector<1x8xf32>
    %57 = vector.shape_cast %56 : vector<1x8xf32> to vector<1x8x1xf32>
    %58 = tpu.reciprocal %57 {approx = true} : vector<1x8x1xf32> -> vector<1x8x1xf32>
    %59 = arith.truncf %55 : vector<1x8x8xf32> to vector<1x8x8xbf16>
    "tpu.trace_start"() <{level = 10 : i32, message = "bqk,bkd->bqd"}> : () -> ()
    %cst_29 = arith.constant dense<0.000000e+00> : vector<1x8x8xf32>
    %60 = tpu.matmul %59, %47, %cst_29 {dimension_numbers = #tpu.dot_dimension_numbers<[2], [1], [1], [2], [0, 0, 0, 1, 1, 2], [0], [0]>} : vector<1x8x8xbf16>, vector<1x8x8xbf16>, vector<1x8x8xf32> -> vector<1x8x8xf32>
    "tpu.trace_stop"() : () -> ()
    %61 = vector.broadcast %58 : vector<1x8x1xf32> to vector<1x8x8xf32>
    %62 = arith.mulf %60, %61 : vector<1x8x8xf32>
    %63 = arith.truncf %62 : vector<1x8x8xf32> to vector<1x8x8xbf16>
    %c0_30 = arith.constant 0 : index
    %c0_31 = arith.constant 0 : index
    %c0_32 = arith.constant 0 : index
    %64 = vector.load %arg20[%c0_30, %c0_31, %c0_32] : memref<1x8x32xbf16, #tpu.memory_space<vmem>>, vector<1x8x8xbf16>
    tpu.vector_store %arg20[%c0_30, %c0_31, %c0_32], %63 {strides = array<i32>} : memref<1x8x32xbf16, #tpu.memory_space<vmem>>, vector<1x8x8xbf16>,
    %c0_33 = arith.constant 0 : index
    %c0_34 = arith.constant 0 : index
    %c8 = arith.constant 8 : index
    %65 = vector.load %arg19[%c0_33, %c0_34, %c8] : memref<1x8x96xbf16, #tpu.memory_space<vmem>>, vector<1x8x8xbf16>
    %c0_35 = arith.constant 0 : index
    %c0_36 = arith.constant 0 : index
    %c40 = arith.constant 40 : index
    %66 = vector.load %arg19[%c0_35, %c0_36, %c40] : memref<1x8x96xbf16, #tpu.memory_space<vmem>>, vector<1x8x8xbf16>
    %c0_37 = arith.constant 0 : index
    %c0_38 = arith.constant 0 : index
    %c72 = arith.constant 72 : index
    %67 = vector.load %arg19[%c0_37, %c0_38, %c72] : memref<1x8x96xbf16, #tpu.memory_space<vmem>>, vector<1x8x8xbf16>
    "tpu.trace_start"() <{level = 10 : i32, message = "bqd,bkd->bqk"}> : () -> ()
    %cst_39 = arith.constant dense<0.000000e+00> : vector<1x8x8xf32>
    %68 = tpu.matmul %65, %66, %cst_39 {dimension_numbers = #tpu.dot_dimension_numbers<[2], [2], [1], [1], [0, 0, 0, 1, 1, 1], [0], [0]>} : vector<1x8x8xbf16>, vector<1x8x8xbf16>, vector<1x8x8xf32> -> vector<1x8x8xf32>
    "tpu.trace_stop"() : () -> ()
    %cst_40 = arith.constant 0.353553385 : f32
    %69 = vector.broadcast %cst_40 : f32 to vector<1x8x8xf32>
    %70 = arith.mulf %68, %69 : vector<1x8x8xf32>
    %cst_41 = arith.constant dense<0xFF800000> : vector<1x8xf32>
    %71 = vector.multi_reduction <maximumf>, %70, %cst_41 [2] : vector<1x8x8xf32> to vector<1x8xf32>
    %72 = vector.shape_cast %71 : vector<1x8xf32> to vector<1x8x1xf32>
    %73 = vector.broadcast %72 : vector<1x8x1xf32> to vector<1x8x8xf32>
    %74 = arith.subf %70, %73 : vector<1x8x8xf32>
    %75 = math.exp %74 : vector<1x8x8xf32>
    %cst_42 = arith.constant dense<0.000000e+00> : vector<1x8xf32>
    %76 = vector.multi_reduction <add>, %75, %cst_42 [2] : vector<1x8x8xf32> to vector<1x8xf32>
    %77 = vector.shape_cast %76 : vector<1x8xf32> to vector<1x8x1xf32>
    %78 = tpu.reciprocal %77 {approx = true} : vector<1x8x1xf32> -> vector<1x8x1xf32>
    %79 = arith.truncf %75 : vector<1x8x8xf32> to vector<1x8x8xbf16>
    "tpu.trace_start"() <{level = 10 : i32, message = "bqk,bkd->bqd"}> : () -> ()
    %cst_43 = arith.constant dense<0.000000e+00> : vector<1x8x8xf32>
    %80 = tpu.matmul %79, %67, %cst_43 {dimension_numbers = #tpu.dot_dimension_numbers<[2], [1], [1], [2], [0, 0, 0, 1, 1, 2], [0], [0]>} : vector<1x8x8xbf16>, vector<1x8x8xbf16>, vector<1x8x8xf32> -> vector<1x8x8xf32>
    "tpu.trace_stop"() : () -> ()
    %81 = vector.broadcast %78 : vector<1x8x1xf32> to vector<1x8x8xf32>
    %82 = arith.mulf %80, %81 : vector<1x8x8xf32>
    %83 = arith.truncf %82 : vector<1x8x8xf32> to vector<1x8x8xbf16>
    %c0_44 = arith.constant 0 : index
    %c0_45 = arith.constant 0 : index
    %c8_46 = arith.constant 8 : index
    %84 = vector.load %arg20[%c0_44, %c0_45, %c8_46] : memref<1x8x32xbf16, #tpu.memory_space<vmem>>, vector<1x8x8xbf16>
    tpu.vector_store %arg20[%c0_44, %c0_45, %c8_46], %83 {strides = array<i32>} : memref<1x8x32xbf16, #tpu.memory_space<vmem>>, vector<1x8x8xbf16>,
    %c0_47 = arith.constant 0 : index
    %c0_48 = arith.constant 0 : index
    %c16 = arith.constant 16 : index
    %85 = vector.load %arg19[%c0_47, %c0_48, %c16] : memref<1x8x96xbf16, #tpu.memory_space<vmem>>, vector<1x8x8xbf16>
    %c0_49 = arith.constant 0 : index
    %c0_50 = arith.constant 0 : index
    %c48 = arith.constant 48 : index
    %86 = vector.load %arg19[%c0_49, %c0_50, %c48] : memref<1x8x96xbf16, #tpu.memory_space<vmem>>, vector<1x8x8xbf16>
    %c0_51 = arith.constant 0 : index
    %c0_52 = arith.constant 0 : index
    %c80 = arith.constant 80 : index
    %87 = vector.load %arg19[%c0_51, %c0_52, %c80] : memref<1x8x96xbf16, #tpu.memory_space<vmem>>, vector<1x8x8xbf16>
    "tpu.trace_start"() <{level = 10 : i32, message = "bqd,bkd->bqk"}> : () -> ()
    %cst_53 = arith.constant dense<0.000000e+00> : vector<1x8x8xf32>
    %88 = tpu.matmul %85, %86, %cst_53 {dimension_numbers = #tpu.dot_dimension_numbers<[2], [2], [1], [1], [0, 0, 0, 1, 1, 1], [0], [0]>} : vector<1x8x8xbf16>, vector<1x8x8xbf16>, vector<1x8x8xf32> -> vector<1x8x8xf32>
    "tpu.trace_stop"() : () -> ()
    %cst_54 = arith.constant 0.353553385 : f32
    %89 = vector.broadcast %cst_54 : f32 to vector<1x8x8xf32>
    %90 = arith.mulf %88, %89 : vector<1x8x8xf32>
    %cst_55 = arith.constant dense<0xFF800000> : vector<1x8xf32>
    %91 = vector.multi_reduction <maximumf>, %90, %cst_55 [2] : vector<1x8x8xf32> to vector<1x8xf32>
    %92 = vector.shape_cast %91 : vector<1x8xf32> to vector<1x8x1xf32>
    %93 = vector.broadcast %92 : vector<1x8x1xf32> to vector<1x8x8xf32>
    %94 = arith.subf %90, %93 : vector<1x8x8xf32>
    %95 = math.exp %94 : vector<1x8x8xf32>
    %cst_56 = arith.constant dense<0.000000e+00> : vector<1x8xf32>
    %96 = vector.multi_reduction <add>, %95, %cst_56 [2] : vector<1x8x8xf32> to vector<1x8xf32>
    %97 = vector.shape_cast %96 : vector<1x8xf32> to vector<1x8x1xf32>
    %98 = tpu.reciprocal %97 {approx = true} : vector<1x8x1xf32> -> vector<1x8x1xf32>
    %99 = arith.truncf %95 : vector<1x8x8xf32> to vector<1x8x8xbf16>
    "tpu.trace_start"() <{level = 10 : i32, message = "bqk,bkd->bqd"}> : () -> ()
    %cst_57 = arith.constant dense<0.000000e+00> : vector<1x8x8xf32>
    %100 = tpu.matmul %99, %87, %cst_57 {dimension_numbers = #tpu.dot_dimension_numbers<[2], [1], [1], [2], [0, 0, 0, 1, 1, 2], [0], [0]>} : vector<1x8x8xbf16>, vector<1x8x8xbf16>, vector<1x8x8xf32> -> vector<1x8x8xf32>
    "tpu.trace_stop"() : () -> ()
    %101 = vector.broadcast %98 : vector<1x8x1xf32> to vector<1x8x8xf32>
    %102 = arith.mulf %100, %101 : vector<1x8x8xf32>
    %103 = arith.truncf %102 : vector<1x8x8xf32> to vector<1x8x8xbf16>
    %c0_58 = arith.constant 0 : index
    %c0_59 = arith.constant 0 : index
    %c16_60 = arith.constant 16 : index
    %104 = vector.load %arg20[%c0_58, %c0_59, %c16_60] : memref<1x8x32xbf16, #tpu.memory_space<vmem>>, vector<1x8x8xbf16>
    tpu.vector_store %arg20[%c0_58, %c0_59, %c16_60], %103 {strides = array<i32>} : memref<1x8x32xbf16, #tpu.memory_space<vmem>>, vector<1x8x8xbf16>,
    %c0_61 = arith.constant 0 : index
    %c0_62 = arith.constant 0 : index
    %c24 = arith.constant 24 : index
    %105 = vector.load %arg19[%c0_61, %c0_62, %c24] : memref<1x8x96xbf16, #tpu.memory_space<vmem>>, vector<1x8x8xbf16>
    %c0_63 = arith.constant 0 : index
    %c0_64 = arith.constant 0 : index
    %c56 = arith.constant 56 : index
    %106 = vector.load %arg19[%c0_63, %c0_64, %c56] : memref<1x8x96xbf16, #tpu.memory_space<vmem>>, vector<1x8x8xbf16>
    %c0_65 = arith.constant 0 : index
    %c0_66 = arith.constant 0 : index
    %c88 = arith.constant 88 : index
    %107 = vector.load %arg19[%c0_65, %c0_66, %c88] : memref<1x8x96xbf16, #tpu.memory_space<vmem>>, vector<1x8x8xbf16>
    "tpu.trace_start"() <{level = 10 : i32, message = "bqd,bkd->bqk"}> : () -> ()
    %cst_67 = arith.constant dense<0.000000e+00> : vector<1x8x8xf32>
    %108 = tpu.matmul %105, %106, %cst_67 {dimension_numbers = #tpu.dot_dimension_numbers<[2], [2], [1], [1], [0, 0, 0, 1, 1, 1], [0], [0]>} : vector<1x8x8xbf16>, vector<1x8x8xbf16>, vector<1x8x8xf32> -> vector<1x8x8xf32>
    "tpu.trace_stop"() : () -> ()
    %cst_68 = arith.constant 0.353553385 : f32
    %109 = vector.broadcast %cst_68 : f32 to vector<1x8x8xf32>
    %110 = arith.mulf %108, %109 : vector<1x8x8xf32>
    %cst_69 = arith.constant dense<0xFF800000> : vector<1x8xf32>
    %111 = vector.multi_reduction <maximumf>, %110, %cst_69 [2] : vector<1x8x8xf32> to vector<1x8xf32>
    %112 = vector.shape_cast %111 : vector<1x8xf32> to vector<1x8x1xf32>
    %113 = vector.broadcast %112 : vector<1x8x1xf32> to vector<1x8x8xf32>
    %114 = arith.subf %110, %113 : vector<1x8x8xf32>
    %115 = math.exp %114 : vector<1x8x8xf32>
    %cst_70 = arith.constant dense<0.000000e+00> : vector<1x8xf32>
    %116 = vector.multi_reduction <add>, %115, %cst_70 [2] : vector<1x8x8xf32> to vector<1x8xf32>
    %117 = vector.shape_cast %116 : vector<1x8xf32> to vector<1x8x1xf32>
    %118 = tpu.reciprocal %117 {approx = true} : vector<1x8x1xf32> -> vector<1x8x1xf32>
    %119 = arith.truncf %115 : vector<1x8x8xf32> to vector<1x8x8xbf16>
    "tpu.trace_start"() <{level = 10 : i32, message = "bqk,bkd->bqd"}> : () -> ()
    %cst_71 = arith.constant dense<0.000000e+00> : vector<1x8x8xf32>
    %120 = tpu.matmul %119, %107, %cst_71 {dimension_numbers = #tpu.dot_dimension_numbers<[2], [1], [1], [2], [0, 0, 0, 1, 1, 2], [0], [0]>} : vector<1x8x8xbf16>, vector<1x8x8xbf16>, vector<1x8x8xf32> -> vector<1x8x8xf32>
    "tpu.trace_stop"() : () -> ()
    %121 = vector.broadcast %118 : vector<1x8x1xf32> to vector<1x8x8xf32>
    %122 = arith.mulf %120, %121 : vector<1x8x8xf32>
    %123 = arith.truncf %122 : vector<1x8x8xf32> to vector<1x8x8xbf16>
    %c0_72 = arith.constant 0 : index
    %c0_73 = arith.constant 0 : index
    %c24_74 = arith.constant 24 : index
    %124 = vector.load %arg20[%c0_72, %c0_73, %c24_74] : memref<1x8x32xbf16, #tpu.memory_space<vmem>>, vector<1x8x8xbf16>
    tpu.vector_store %arg20[%c0_72, %c0_73, %c24_74], %123 {strides = array<i32>} : memref<1x8x32xbf16, #tpu.memory_space<vmem>>, vector<1x8x8xbf16>,
    %c0_75 = arith.constant 0 : index
    %c0_76 = arith.constant 0 : index
    %c0_77 = arith.constant 0 : index
    %125 = vector.load %arg20[%c0_75, %c0_76, %c0_77] : memref<1x8x32xbf16, #tpu.memory_space<vmem>>, vector<1x8x32xbf16>
    %126 = vector.shape_cast %125 : vector<1x8x32xbf16> to vector<8x32xbf16>
    %127 = arith.index_cast %arg1 : i32 to index
    %c0_78 = arith.constant 0 : index
    %c0_79 = arith.constant 0 : index
    %128 = vector.load %arg7[%127, %c0_78, %c0_79] : memref<2x32x32xbf16, #tpu.memory_space<vmem>>, vector<1x32x32xbf16>
    %129 = vector.shape_cast %128 : vector<1x32x32xbf16> to vector<32x32xbf16>
    %cst_80 = arith.constant dense<0.000000e+00> : vector<8x32xf32>
    %130 = tpu.matmul %126, %129, %cst_80 {dimension_numbers = #tpu.dot_dimension_numbers<[1], [0], [0], [1], [0, 0, 1, 1], [], []>} : vector<8x32xbf16>, vector<32x32xbf16>, vector<8x32xf32> -> vector<8x32xf32>
    %131 = arith.index_cast %arg1 : i32 to index
    %c0_81 = arith.constant 0 : index
    %c0_82 = arith.constant 0 : index
    %132 = vector.load %arg8[%131, %c0_81, %c0_82] : memref<2x1x32xf32, #tpu.memory_space<vmem>>, vector<1x1x32xf32>
    %133 = vector.shape_cast %132 : vector<1x1x32xf32> to vector<1x32xf32>
    %134 = vector.broadcast %133 : vector<1x32xf32> to vector<8x32xf32>
    %135 = arith.addf %130, %134 : vector<8x32xf32>
    %136 = arith.addf %3, %135 : vector<8x32xf32>
    %137 = arith.index_cast %arg1 : i32 to index
    %c0_83 = arith.constant 0 : index
    %c0_84 = arith.constant 0 : index
    %138 = vector.load %arg9[%137, %c0_83, %c0_84] : memref<2x1x32xf32, #tpu.memory_space<vmem>>, vector<1x1x32xf32>
    %139 = vector.shape_cast %138 : vector<1x1x32xf32> to vector<1x32xf32>
    %140 = arith.index_cast %arg1 : i32 to index
    %c0_85 = arith.constant 0 : index
    %c0_86 = arith.constant 0 : index
    %141 = vector.load %arg10[%140, %c0_85, %c0_86] : memref<2x1x32xf32, #tpu.memory_space<vmem>>, vector<1x1x32xf32>
    %142 = vector.shape_cast %141 : vector<1x1x32xf32> to vector<1x32xf32>
    %cst_87 = arith.constant dense<0.000000e+00> : vector<8xf32>
    %143 = vector.multi_reduction <add>, %136, %cst_87 [1] : vector<8x32xf32> to vector<8xf32>
    %144 = vector.shape_cast %143 : vector<8xf32> to vector<8x1xf32>
    %cst_88 = arith.constant 3.200000e+01 : f32
    %145 = vector.broadcast %cst_88 : f32 to vector<8x1xf32>
    %146 = arith.divf %144, %145 : vector<8x1xf32>
    %147 = vector.broadcast %146 : vector<8x1xf32> to vector<8x32xf32>
    %148 = arith.subf %136, %147 : vector<8x32xf32>
    %149 = arith.mulf %148, %148 : vector<8x32xf32>
    %cst_89 = arith.constant dense<0.000000e+00> : vector<8xf32>
    %150 = vector.multi_reduction <add>, %149, %cst_89 [1] : vector<8x32xf32> to vector<8xf32>
    %151 = vector.shape_cast %150 : vector<8xf32> to vector<8x1xf32>
    %cst_90 = arith.constant 3.200000e+01 : f32
    %152 = vector.broadcast %cst_90 : f32 to vector<8x1xf32>
    %153 = arith.divf %151, %152 : vector<8x1xf32>
    %154 = vector.broadcast %146 : vector<8x1xf32> to vector<8x32xf32>
    %155 = arith.subf %136, %154 : vector<8x32xf32>
    %cst_91 = arith.constant 9.99999974E-6 : f32
    %156 = vector.broadcast %cst_91 : f32 to vector<8x1xf32>
    %157 = arith.addf %153, %156 : vector<8x1xf32>
    %158 = math.rsqrt %157 : vector<8x1xf32>
    %159 = vector.broadcast %158 : vector<8x1xf32> to vector<8x32xf32>
    %160 = arith.mulf %155, %159 : vector<8x32xf32>
    %161 = vector.broadcast %139 : vector<1x32xf32> to vector<8x32xf32>
    %162 = arith.mulf %160, %161 : vector<8x32xf32>
    %163 = vector.broadcast %142 : vector<1x32xf32> to vector<8x32xf32>
    %164 = arith.addf %162, %163 : vector<8x32xf32>
    %165 = arith.truncf %164 : vector<8x32xf32> to vector<8x32xbf16>
    %166 = arith.index_cast %arg1 : i32 to index
    %c0_92 = arith.constant 0 : index
    %c0_93 = arith.constant 0 : index
    %167 = vector.load %arg11[%166, %c0_92, %c0_93] : memref<2x32x64xbf16, #tpu.memory_space<vmem>>, vector<1x32x64xbf16>
    %168 = vector.shape_cast %167 : vector<1x32x64xbf16> to vector<32x64xbf16>
    %cst_94 = arith.constant dense<0.000000e+00> : vector<8x64xf32>
    %169 = tpu.matmul %165, %168, %cst_94 {dimension_numbers = #tpu.dot_dimension_numbers<[1], [0], [0], [1], [0, 0, 1, 1], [], []>} : vector<8x32xbf16>, vector<32x64xbf16>, vector<8x64xf32> -> vector<8x64xf32>
    %170 = arith.index_cast %arg1 : i32 to index
    %c0_95 = arith.constant 0 : index
    %c0_96 = arith.constant 0 : index
    %171 = vector.load %arg12[%170, %c0_95, %c0_96] : memref<2x1x64xf32, #tpu.memory_space<vmem>>, vector<1x1x64xf32>
    %172 = vector.shape_cast %171 : vector<1x1x64xf32> to vector<1x64xf32>
    %173 = vector.broadcast %172 : vector<1x64xf32> to vector<8x64xf32>
    %174 = arith.addf %169, %173 : vector<8x64xf32>
    %cst_97 = arith.constant 0.000000e+00 : f32
    %175 = vector.broadcast %cst_97 : f32 to vector<8x64xf32>
    %176 = arith.maximumf %174, %175 : vector<8x64xf32>
    %177 = arith.truncf %176 : vector<8x64xf32> to vector<8x64xbf16>
    %178 = arith.index_cast %arg1 : i32 to index
    %c0_98 = arith.constant 0 : index
    %c0_99 = arith.constant 0 : index
    %179 = vector.load %arg13[%178, %c0_98, %c0_99] : memref<2x64x32xbf16, #tpu.memory_space<vmem>>, vector<1x64x32xbf16>
    %180 = vector.shape_cast %179 : vector<1x64x32xbf16> to vector<64x32xbf16>
    %cst_100 = arith.constant dense<0.000000e+00> : vector<8x32xf32>
    %181 = tpu.matmul %177, %180, %cst_100 {dimension_numbers = #tpu.dot_dimension_numbers<[1], [0], [0], [1], [0, 0, 1, 1], [], []>} : vector<8x64xbf16>, vector<64x32xbf16>, vector<8x32xf32> -> vector<8x32xf32>
    %182 = arith.index_cast %arg1 : i32 to index
    %c0_101 = arith.constant 0 : index
    %c0_102 = arith.constant 0 : index
    %183 = vector.load %arg14[%182, %c0_101, %c0_102] : memref<2x1x32xf32, #tpu.memory_space<vmem>>, vector<1x1x32xf32>
    %184 = vector.shape_cast %183 : vector<1x1x32xf32> to vector<1x32xf32>
    %185 = vector.broadcast %184 : vector<1x32xf32> to vector<8x32xf32>
    %186 = arith.addf %181, %185 : vector<8x32xf32>
    %187 = arith.addf %136, %186 : vector<8x32xf32>
    %c0_103 = arith.constant 0 : index
    %c0_104 = arith.constant 0 : index
    %188 = vector.load %arg18[%c0_103, %c0_104] : memref<8x32xf32, #tpu.memory_space<vmem>>, vector<8x32xf32>
    tpu.vector_store %arg18[%c0_103, %c0_104], %187 {strides = array<i32>} : memref<8x32xf32, #tpu.memory_space<vmem>>, vector<8x32xf32>,
    %c1_i32 = arith.constant 1 : i32
    %189 = arith.cmpi eq, %arg1, %c1_i32 : i32
    %190 = arith.extui %189 : i1 to i32
    %c0_i32_105 = arith.constant 0 : i32
    %191 = arith.cmpi ne, %190, %c0_i32_105 : i32
    scf.if %191 {
      %c0_106 = arith.constant 0 : index
      %c0_107 = arith.constant 0 : index
      %192 = vector.load %arg15[%c0_106, %c0_107] : memref<1x32xf32, #tpu.memory_space<vmem>>, vector<1x32xf32>
      %c0_108 = arith.constant 0 : index
      %c0_109 = arith.constant 0 : index
      %193 = vector.load %arg16[%c0_108, %c0_109] : memref<1x32xf32, #tpu.memory_space<vmem>>, vector<1x32xf32>
      %cst_110 = arith.constant dense<0.000000e+00> : vector<8xf32>
      %194 = vector.multi_reduction <add>, %187, %cst_110 [1] : vector<8x32xf32> to vector<8xf32>
      %195 = vector.shape_cast %194 : vector<8xf32> to vector<8x1xf32>
      %cst_111 = arith.constant 3.200000e+01 : f32
      %196 = vector.broadcast %cst_111 : f32 to vector<8x1xf32>
      %197 = arith.divf %195, %196 : vector<8x1xf32>
      %198 = vector.broadcast %197 : vector<8x1xf32> to vector<8x32xf32>
      %199 = arith.subf %187, %198 : vector<8x32xf32>
      %200 = arith.mulf %199, %199 : vector<8x32xf32>
      %cst_112 = arith.constant dense<0.000000e+00> : vector<8xf32>
      %201 = vector.multi_reduction <add>, %200, %cst_112 [1] : vector<8x32xf32> to vector<8xf32>
      %202 = vector.shape_cast %201 : vector<8xf32> to vector<8x1xf32>
      %cst_113 = arith.constant 3.200000e+01 : f32
      %203 = vector.broadcast %cst_113 : f32 to vector<8x1xf32>
      %204 = arith.divf %202, %203 : vector<8x1xf32>
      %205 = vector.broadcast %197 : vector<8x1xf32> to vector<8x32xf32>
      %206 = arith.subf %187, %205 : vector<8x32xf32>
      %cst_114 = arith.constant 9.99999974E-6 : f32
      %207 = vector.broadcast %cst_114 : f32 to vector<8x1xf32>
      %208 = arith.addf %204, %207 : vector<8x1xf32>
      %209 = math.rsqrt %208 : vector<8x1xf32>
      %210 = vector.broadcast %209 : vector<8x1xf32> to vector<8x32xf32>
      %211 = arith.mulf %206, %210 : vector<8x32xf32>
      %212 = vector.broadcast %192 : vector<1x32xf32> to vector<8x32xf32>
      %213 = arith.mulf %211, %212 : vector<8x32xf32>
      %214 = vector.broadcast %193 : vector<1x32xf32> to vector<8x32xf32>
      %215 = arith.addf %213, %214 : vector<8x32xf32>
      %216 = vector.shape_cast %215 : vector<8x32xf32> to vector<1x8x32xf32>
      %c0_115 = arith.constant 0 : index
      %c0_116 = arith.constant 0 : index
      %c0_117 = arith.constant 0 : index
      %217 = vector.load %arg17[%c0_115, %c0_116, %c0_117] : memref<1x8x32xf32, #tpu.memory_space<vmem>>, vector<1x8x32xf32>
      tpu.vector_store %arg17[%c0_115, %c0_116, %c0_117], %216 {strides = array<i32>} : memref<1x8x32xf32, #tpu.memory_space<vmem>>, vector<1x8x32xf32>,
    } else {
    }
    return
  }
  func.func @transform_0(%arg0: i32, %arg1: i32) -> (i32, i32, i32) {
    %c0_i32 = arith.constant 0 : i32
    %c0_i32_0 = arith.constant 0 : i32
    %c0_i32_1 = arith.constant 0 : i32
    return %arg0, %c0_i32, %c0_i32_0 : i32, i32, i32
  }
  func.func @transform_1(%arg0: i32, %arg1: i32) -> (i32, i32, i32) {
    %c0_i32 = arith.constant 0 : i32
    %c0_i32_0 = arith.constant 0 : i32
    %c0_i32_1 = arith.constant 0 : i32
    %c0_i32_2 = arith.constant 0 : i32
    return %c0_i32, %c0_i32_0, %c0_i32_1 : i32, i32, i32
  }
  func.func @transform_2(%arg0: i32, %arg1: i32) -> (i32, i32, i32) {
    %c0_i32 = arith.constant 0 : i32
    %c0_i32_0 = arith.constant 0 : i32
    %c0_i32_1 = arith.constant 0 : i32
    %c0_i32_2 = arith.constant 0 : i32
    return %c0_i32, %c0_i32_0, %c0_i32_1 : i32, i32, i32
  }
  func.func @transform_3(%arg0: i32, %arg1: i32) -> (i32, i32, i32) {
    %c0_i32 = arith.constant 0 : i32
    %c0_i32_0 = arith.constant 0 : i32
    %c0_i32_1 = arith.constant 0 : i32
    %c0_i32_2 = arith.constant 0 : i32
    return %c0_i32, %c0_i32_0, %c0_i32_1 : i32, i32, i32
  }
  func.func @transform_4(%arg0: i32, %arg1: i32) -> (i32, i32, i32) {
    %c0_i32 = arith.constant 0 : i32
    %c0_i32_0 = arith.constant 0 : i32
    %c0_i32_1 = arith.constant 0 : i32
    %c0_i32_2 = arith.constant 0 : i32
    return %c0_i32, %c0_i32_0, %c0_i32_1 : i32, i32, i32
  }
  func.func @transform_5(%arg0: i32, %arg1: i32) -> (i32, i32, i32) {
    %c0_i32 = arith.constant 0 : i32
    %c0_i32_0 = arith.constant 0 : i32
    %c0_i32_1 = arith.constant 0 : i32
    %c0_i32_2 = arith.constant 0 : i32
    return %c0_i32, %c0_i32_0, %c0_i32_1 : i32, i32, i32
  }
  func.func @transform_6(%arg0: i32, %arg1: i32) -> (i32, i32, i32) {
    %c0_i32 = arith.constant 0 : i32
    %c0_i32_0 = arith.constant 0 : i32
    %c0_i32_1 = arith.constant 0 : i32
    %c0_i32_2 = arith.constant 0 : i32
    return %c0_i32, %c0_i32_0, %c0_i32_1 : i32, i32, i32
  }
  func.func @transform_7(%arg0: i32, %arg1: i32) -> (i32, i32, i32) {
    %c0_i32 = arith.constant 0 : i32
    %c0_i32_0 = arith.constant 0 : i32
    %c0_i32_1 = arith.constant 0 : i32
    %c0_i32_2 = arith.constant 0 : i32
    return %c0_i32, %c0_i32_0, %c0_i32_1 : i32, i32, i32
  }
  func.func @transform_8(%arg0: i32, %arg1: i32) -> (i32, i32, i32) {
    %c0_i32 = arith.constant 0 : i32
    %c0_i32_0 = arith.constant 0 : i32
    %c0_i32_1 = arith.constant 0 : i32
    %c0_i32_2 = arith.constant 0 : i32
    return %c0_i32, %c0_i32_0, %c0_i32_1 : i32, i32, i32
  }
  func.func @transform_9(%arg0: i32, %arg1: i32) -> (i32, i32, i32) {
    %c0_i32 = arith.constant 0 : i32
    %c0_i32_0 = arith.constant 0 : i32
    %c0_i32_1 = arith.constant 0 : i32
    %c0_i32_2 = arith.constant 0 : i32
    return %c0_i32, %c0_i32_0, %c0_i32_1 : i32, i32, i32
  }
  func.func @transform_10(%arg0: i32, %arg1: i32) -> (i32, i32, i32) {
    %c0_i32 = arith.constant 0 : i32
    %c0_i32_0 = arith.constant 0 : i32
    %c0_i32_1 = arith.constant 0 : i32
    %c0_i32_2 = arith.constant 0 : i32
    return %c0_i32, %c0_i32_0, %c0_i32_1 : i32, i32, i32
  }
  func.func @transform_11(%arg0: i32, %arg1: i32) -> (i32, i32, i32) {
    %c0_i32 = arith.constant 0 : i32
    %c0_i32_0 = arith.constant 0 : i32
    %c0_i32_1 = arith.constant 0 : i32
    %c0_i32_2 = arith.constant 0 : i32
    return %c0_i32, %c0_i32_0, %c0_i32_1 : i32, i32, i32
  }
  func.func @transform_12(%arg0: i32, %arg1: i32) -> (i32, i32, i32) {
    %c0_i32 = arith.constant 0 : i32
    %c0_i32_0 = arith.constant 0 : i32
    %c0_i32_1 = arith.constant 0 : i32
    %c0_i32_2 = arith.constant 0 : i32
    return %c0_i32, %c0_i32_0, %c0_i32_1 : i32, i32, i32
  }
  func.func @transform_13(%arg0: i32, %arg1: i32) -> (i32, i32) {
    %c0_i32 = arith.constant 0 : i32
    %c0_i32_0 = arith.constant 0 : i32
    %c0_i32_1 = arith.constant 0 : i32
    return %c0_i32, %c0_i32_0 : i32, i32
  }
  func.func @transform_14(%arg0: i32, %arg1: i32) -> (i32, i32) {
    %c0_i32 = arith.constant 0 : i32
    %c0_i32_0 = arith.constant 0 : i32
    %c0_i32_1 = arith.constant 0 : i32
    return %c0_i32, %c0_i32_0 : i32, i32
  }
  func.func @transform_15(%arg0: i32, %arg1: i32) -> (i32, i32, i32) {
    %c0_i32 = arith.constant 0 : i32
    %c0_i32_0 = arith.constant 0 : i32
    %c0_i32_1 = arith.constant 0 : i32
    return %arg0, %c0_i32, %c0_i32_0 : i32, i32, i32
  }
}

</mosaic_0001>

<llo_original>
// kernel: tpu_custom_call.1
$region0: #{tpu_custom_call.1}
  #allocation0 [shape = 'u32[]', space=smem, size = 0x4, offset = 0x4, fixed_abs, tag = 'smem constant byte address 0x4 - core index']
  #allocation1 [shape = 'u32[72,128]{1,0:T(1,128)}', space=vmem, size = 0x9000, scoped, tag = 'internal scratch']
  #allocation2 [shape = 'f32[8,32]{1,0:T(8,128)}', space=vmem, size = 0x1000, scoped, tag = 'scratch operand']
  #allocation3 [shape = 'bf16[1,8,96]{2,1,0:T(8,128)(2,1)}', space=vmem, size = 0x800, scoped, tag = 'scratch operand']
  #allocation4 [shape = 'bf16[1,8,32]{2,1,0:T(8,128)(2,1)}', space=vmem, size = 0x800, scoped, tag = 'scratch operand']
  %s0 = inlined_call_operand.hbm [shape: f32[2,8,32], index: 0, kind: input, shape index: {}]
  %s1 = inlined_call_operand.hbm [shape: f32[2,1,32], index: 1, kind: input, shape index: {}]
  %s2 = inlined_call_operand.hbm [shape: f32[2,1,32], index: 2, kind: input, shape index: {}]
  %s3 = inlined_call_operand.vmem [shape: bf16[2,32,96], index: 3, kind: input, shape index: {}]
  %s4 = inlined_call_operand.vmem [shape: f32[2,1,96], index: 4, kind: input, shape index: {}]
  %s5 = inlined_call_operand.vmem [shape: bf16[2,32,32], index: 5, kind: input, shape index: {}]
  %s6 = inlined_call_operand.vmem [shape: f32[2,1,32], index: 6, kind: input, shape index: {}]
  %s7 = inlined_call_operand.hbm [shape: f32[2,1,32], index: 7, kind: input, shape index: {}]
  %s8 = inlined_call_operand.vmem [shape: f32[2,1,32], index: 8, kind: input, shape index: {}]
  %s9 = inlined_call_operand.vmem [shape: bf16[2,32,64], index: 9, kind: input, shape index: {}]
  %s10 = inlined_call_operand.vmem [shape: f32[2,1,64], index: 10, kind: input, shape index: {}]
  %s11 = inlined_call_operand.vmem [shape: bf16[2,64,32], index: 11, kind: input, shape index: {}]
  %s12 = inlined_call_operand.vmem [shape: f32[2,1,32], index: 12, kind: input, shape index: {}]
  %s13 = inlined_call_operand.vmem [shape: f32[1,32], index: 13, kind: input, shape index: {}]
  %s14 = inlined_call_operand.vmem [shape: f32[1,32], index: 14, kind: input, shape index: {}]
  %s15 = inlined_call_operand.hbm [shape: f32[2,8,32], index: 15, kind: output, shape index: {}]
  %s16 = sld [smem:[#allocation0]]
  $region117: #{tpu_custom_call.1} parent=0
    _
  %s18 = ssub.s32 1, %s16
  %s19 = scalar_select 0, %s18, %s16
  $region1: #{tpu_custom_call.1} parent=0
    #allocation5 [shape = 'u8[8192]{0}', space=vmem, size = 0x2000, scoped, tag = 'input window, operand 0']
    #allocation6 [shape = 's32[2]{0}', space=sflag, size = 0x8, scoped, tag = 'scoped memory for tpu_custom_call.1']
    #allocation7 [shape = 's32[2]{0}', space=sflag, size = 0x8, scoped, tag = 'scoped memory for tpu_custom_call.1']
    #allocation8 [shape = 'u8[1024]{0}', space=vmem, size = 0x400, scoped, tag = 'input window, operand 1, single buffered']
    #allocation9 [shape = 's32[1]{0}', space=sflag, size = 0x4, scoped, tag = 'scoped memory for tpu_custom_call.1']
    #allocation10 [shape = 'u8[1024]{0}', space=vmem, size = 0x400, scoped, tag = 'input window, operand 2, single buffered']
    #allocation11 [shape = 'u8[1024]{0}', space=vmem, size = 0x400, scoped, tag = 'input window, operand 7, single buffered']
    #allocation12 [shape = 's32[1]{0}', space=sflag, size = 0x4, scoped, tag = 'scoped memory for tpu_custom_call.1']
    #allocation13 [shape = 'u8[8192]{0}', space=vmem, size = 0x2000, scoped, tag = 'output window, operand 0']
    %20 = vsyncpa [#allocation6], 0
    %s21 = scalar_lea.sflag [#allocation6], 1
    %22 = vsyncpa %s21, 0
    %23 = vsyncpa [#allocation9], 0
    %24 = vsyncpa [#allocation12], 0
    %25 = vsyncpa [#allocation7], 0
    %s26 = scalar_lea.sflag [#allocation7], 1
    %27 = vsyncpa %s26, 0
    loop: start=0, step=1, limit=6
    $region2: #{tpu_custom_call.1} parent=1 // loop_pre_header
      _
    $region3: #{tpu_custom_call.1} parent=1 // loop_header
      %s29 = sphi 0, %s33
      %p30 = scmp.ge.s32.totalorder %s29, 6
      %s36 = sphi 0, %s48
      %s37 = sphi 0, %s44
      %s38 = sphi 0, %s36
      %s39 = sphi 0, %s37
      %s40 = sphi 0, %s38
      %s41 = sphi 0, %s39
      %s51 = sphi 0, %s53
      %s54 = sphi 0, %s51
      %s55 = sphi 0, %s54
      %s71 = sphi 0, %s55
      %s75 = sphi 0, %s75
      %s77 = sphi 0, %s75
      %s78 = sphi 0, %s77
      %s92 = sphi 0, %s78
      %s96 = sphi 0, %s96
      %s98 = sphi 0, %s96
      %s99 = sphi 0, %s98
      %s113 = sphi 0, %s99
      %s117 = sphi 0, %s117
      %s119 = sphi 0, %s117
      %s120 = sphi 0, %s119
      %s134 = sphi 0, %s120
      %s138 = sphi 0, %s138
      %s140 = sphi 0, %s138
      %s141 = sphi 0, %s140
      %s155 = sphi 0, %s141
      %s159 = sphi 0, %s159
      %s161 = sphi 0, %s159
      %s162 = sphi 0, %s161
      %s176 = sphi 0, %s162
      %s180 = sphi 0, %s180
      %s182 = sphi 0, %s180
      %s183 = sphi 0, %s182
      %s197 = sphi 0, %s183
      %s201 = sphi 0, %s201
      %s203 = sphi 0, %s201
      %s204 = sphi 0, %s203
      %s218 = sphi 0, %s204
      %s222 = sphi 0, %s222
      %s224 = sphi 0, %s222
      %s225 = sphi 0, %s224
      %s239 = sphi 0, %s225
      %s243 = sphi 0, %s243
      %s245 = sphi 0, %s243
      %s246 = sphi 0, %s245
      %s260 = sphi 0, %s246
      %s264 = sphi 0, %s264
      %s266 = sphi 0, %s264
      %s267 = sphi 0, %s266
      %s281 = sphi 0, %s267
      %s285 = sphi 0, %s285
      %s287 = sphi 0, %s285
      %s288 = sphi 0, %s287
      %s302 = sphi 0, %s288
      %s306 = sphi 0, %s306
      %s308 = sphi 0, %s306
      %s309 = sphi 0, %s308
      %s323 = sphi 0, %s309
      %s327 = sphi 0, %s327
      %s329 = sphi 0, %s327
      %s330 = sphi 0, %s329
      %s344 = sphi 0, %s330
      %s348 = sphi 0, %s348
      %s350 = sphi 0, %s348
      %s351 = sphi 0, %s350
      %s365 = sphi 0, %s351
      %s371 = sphi 0, %s373
      %s374 = sphi 0, %s371
      %s375 = sphi 0, %s374
      %s391 = sphi 0, %s375
    $region4: #{tpu_custom_call.1} parent=1 // loop_header_branch
      %32 = sbr.rel (%p30) target = $region8
    $region5: #{tpu_custom_call.1} parent=1 // loop_body
      %s34 = ssub.s32 %s29, 1
      %s35 = ssub.s32 %s29, 2
      %s42 = sadd.s32 1, %s37
      %p43 = scmp.ge.s32.totalorder %s42, 2
      %s44 = scalar_select %p43, 0, %s42
      %s45 = sadd.s32 1, %s36
      %s46 = scalar_select %p43, %s45, %s36
      %p47 = scmp.ge.s32.totalorder %s46, 2
      %s48 = scalar_select %p47, 0, %s46
      %s49 = ssub.s32 %s36, %s48
      %p50 = scmp.eq.s32.totalorder %s49, 0
      %s52 = sadd.s32 %s51, 1
      %s53 = scalar_select %p50, %s51, %s52
      %p56 = pneg %p50
      %p57 = scmp.eq.s32.totalorder %s29, 3
      %p58 = por %p56, %p57
      %p59 = scmp.ne.s32.totalorder %s51, %s54
      %p60 = scmp.eq.s32.totalorder %s29, 0
      %p61 = por %p59, %p60
      %p62 = scmp.ne.s32.totalorder %s51, %s54
      %p63 = scmp.eq.s32.totalorder %s34, 3
      %p64 = por %p62, %p63
      %p65 = scmp.ne.s32.totalorder %s54, %s55
      %p66 = scmp.eq.s32.totalorder %s34, 0
      %p67 = por %p65, %p66
      %p68 = scmp.ne.s32.totalorder %s54, %s55
      %p69 = scmp.eq.s32.totalorder %s35, 3
      %p70 = por %p68, %p69
      %p72 = scmp.ne.s32.totalorder %s55, %s71
      %p73 = scmp.eq.s32.totalorder %s35, 0
      %p74 = por %p72, %p73
      %s76 = sadd.s32 %s75, 1
      %p79 = scmp.eq.s32.totalorder %s29, 3
      %p80 = scmp.ne.s32.totalorder %s75, %s77
      %p81 = scmp.eq.s32.totalorder %s29, 0
      %p82 = por %p80, %p81
      %p83 = scmp.ne.s32.totalorder %s75, %s77
      %p84 = scmp.eq.s32.totalorder %s34, 3
      %p85 = por %p83, %p84
      %p86 = scmp.ne.s32.totalorder %s77, %s78
      %p87 = scmp.eq.s32.totalorder %s34, 0
      %p88 = por %p86, %p87
      %p89 = scmp.ne.s32.totalorder %s77, %s78
      %p90 = scmp.eq.s32.totalorder %s35, 3
      %p91 = por %p89, %p90
      %p93 = scmp.ne.s32.totalorder %s78, %s92
      %p94 = scmp.eq.s32.totalorder %s35, 0
      %p95 = por %p93, %p94
      %s97 = sadd.s32 %s96, 1
      %p100 = scmp.eq.s32.totalorder %s29, 3
      %p101 = scmp.ne.s32.totalorder %s96, %s98
      %p102 = scmp.eq.s32.totalorder %s29, 0
      %p103 = por %p101, %p102
      %p104 = scmp.ne.s32.totalorder %s96, %s98
      %p105 = scmp.eq.s32.totalorder %s34, 3
      %p106 = por %p104, %p105
      %p107 = scmp.ne.s32.totalorder %s98, %s99
      %p108 = scmp.eq.s32.totalorder %s34, 0
      %p109 = por %p107, %p108
      %p110 = scmp.ne.s32.totalorder %s98, %s99
      %p111 = scmp.eq.s32.totalorder %s35, 3
      %p112 = por %p110, %p111
      %p114 = scmp.ne.s32.totalorder %s99, %s113
      %p115 = scmp.eq.s32.totalorder %s35, 0
      %p116 = por %p114, %p115
      %s118 = sadd.s32 %s117, 1
      %p121 = scmp.eq.s32.totalorder %s29, 3
      %p122 = scmp.ne.s32.totalorder %s117, %s119
      %p123 = scmp.eq.s32.totalorder %s29, 0
      %p124 = por %p122, %p123
      %p125 = scmp.ne.s32.totalorder %s117, %s119
      %p126 = scmp.eq.s32.totalorder %s34, 3
      %p127 = por %p125, %p126
      %p128 = scmp.ne.s32.totalorder %s119, %s120
      %p129 = scmp.eq.s32.totalorder %s34, 0
      %p130 = por %p128, %p129
      %p131 = scmp.ne.s32.totalorder %s119, %s120
      %p132 = scmp.eq.s32.totalorder %s35, 3
      %p133 = por %p131, %p132
      %p135 = scmp.ne.s32.totalorder %s120, %s134
      %p136 = scmp.eq.s32.totalorder %s35, 0
      %p137 = por %p135, %p136
      %s139 = sadd.s32 %s138, 1
      %p142 = scmp.eq.s32.totalorder %s29, 3
      %p143 = scmp.ne.s32.totalorder %s138, %s140
      %p144 = scmp.eq.s32.totalorder %s29, 0
      %p145 = por %p143, %p144
      %p146 = scmp.ne.s32.totalorder %s138, %s140
      %p147 = scmp.eq.s32.totalorder %s34, 3
      %p148 = por %p146, %p147
      %p149 = scmp.ne.s32.totalorder %s140, %s141
      %p150 = scmp.eq.s32.totalorder %s34, 0
      %p151 = por %p149, %p150
      %p152 = scmp.ne.s32.totalorder %s140, %s141
      %p153 = scmp.eq.s32.totalorder %s35, 3
      %p154 = por %p152, %p153
      %p156 = scmp.ne.s32.totalorder %s141, %s155
      %p157 = scmp.eq.s32.totalorder %s35, 0
      %p158 = por %p156, %p157
      %s160 = sadd.s32 %s159, 1
      %p163 = scmp.eq.s32.totalorder %s29, 3
      %p164 = scmp.ne.s32.totalorder %s159, %s161
      %p165 = scmp.eq.s32.totalorder %s29, 0
      %p166 = por %p164, %p165
      %p167 = scmp.ne.s32.totalorder %s159, %s161
      %p168 = scmp.eq.s32.totalorder %s34, 3
      %p169 = por %p167, %p168
      %p170 = scmp.ne.s32.totalorder %s161, %s162
      %p171 = scmp.eq.s32.totalorder %s34, 0
      %p172 = por %p170, %p171
      %p173 = scmp.ne.s32.totalorder %s161, %s162
      %p174 = scmp.eq.s32.totalorder %s35, 3
      %p175 = por %p173, %p174
      %p177 = scmp.ne.s32.totalorder %s162, %s176
      %p178 = scmp.eq.s32.totalorder %s35, 0
      %p179 = por %p177, %p178
      %s181 = sadd.s32 %s180, 1
      %p184 = scmp.eq.s32.totalorder %s29, 3
      %p185 = scmp.ne.s32.totalorder %s180, %s182
      %p186 = scmp.eq.s32.totalorder %s29, 0
      %p187 = por %p185, %p186
      %p188 = scmp.ne.s32.totalorder %s180, %s182
      %p189 = scmp.eq.s32.totalorder %s34, 3
      %p190 = por %p188, %p189
      %p191 = scmp.ne.s32.totalorder %s182, %s183
      %p192 = scmp.eq.s32.totalorder %s34, 0
      %p193 = por %p191, %p192
      %p194 = scmp.ne.s32.totalorder %s182, %s183
      %p195 = scmp.eq.s32.totalorder %s35, 3
      %p196 = por %p194, %p195
      %p198 = scmp.ne.s32.totalorder %s183, %s197
      %p199 = scmp.eq.s32.totalorder %s35, 0
      %p200 = por %p198, %p199
      %s202 = sadd.s32 %s201, 1
      %p205 = scmp.eq.s32.totalorder %s29, 3
      %p206 = scmp.ne.s32.totalorder %s201, %s203
      %p207 = scmp.eq.s32.totalorder %s29, 0
      %p208 = por %p206, %p207
      %p209 = scmp.ne.s32.totalorder %s201, %s203
      %p210 = scmp.eq.s32.totalorder %s34, 3
      %p211 = por %p209, %p210
      %p212 = scmp.ne.s32.totalorder %s203, %s204
      %p213 = scmp.eq.s32.totalorder %s34, 0
      %p214 = por %p212, %p213
      %p215 = scmp.ne.s32.totalorder %s203, %s204
      %p216 = scmp.eq.s32.totalorder %s35, 3
      %p217 = por %p215, %p216
      %p219 = scmp.ne.s32.totalorder %s204, %s218
      %p220 = scmp.eq.s32.totalorder %s35, 0
      %p221 = por %p219, %p220
      %s223 = sadd.s32 %s222, 1
      %p226 = scmp.eq.s32.totalorder %s29, 3
      %p227 = scmp.ne.s32.totalorder %s222, %s224
      %p228 = scmp.eq.s32.totalorder %s29, 0
      %p229 = por %p227, %p228
      %p230 = scmp.ne.s32.totalorder %s222, %s224
      %p231 = scmp.eq.s32.totalorder %s34, 3
      %p232 = por %p230, %p231
      %p233 = scmp.ne.s32.totalorder %s224, %s225
      %p234 = scmp.eq.s32.totalorder %s34, 0
      %p235 = por %p233, %p234
      %p236 = scmp.ne.s32.totalorder %s224, %s225
      %p237 = scmp.eq.s32.totalorder %s35, 3
      %p238 = por %p236, %p237
      %p240 = scmp.ne.s32.totalorder %s225, %s239
      %p241 = scmp.eq.s32.totalorder %s35, 0
      %p242 = por %p240, %p241
      %s244 = sadd.s32 %s243, 1
      %p247 = scmp.eq.s32.totalorder %s29, 3
      %p248 = scmp.ne.s32.totalorder %s243, %s245
      %p249 = scmp.eq.s32.totalorder %s29, 0
      %p250 = por %p248, %p249
      %p251 = scmp.ne.s32.totalorder %s243, %s245
      %p252 = scmp.eq.s32.totalorder %s34, 3
      %p253 = por %p251, %p252
      %p254 = scmp.ne.s32.totalorder %s245, %s246
      %p255 = scmp.eq.s32.totalorder %s34, 0
      %p256 = por %p254, %p255
      %p257 = scmp.ne.s32.totalorder %s245, %s246
      %p258 = scmp.eq.s32.totalorder %s35, 3
      %p259 = por %p257, %p258
      %p261 = scmp.ne.s32.totalorder %s246, %s260
      %p262 = scmp.eq.s32.totalorder %s35, 0
      %p263 = por %p261, %p262
      %s265 = sadd.s32 %s264, 1
      %p268 = scmp.eq.s32.totalorder %s29, 3
      %p269 = scmp.ne.s32.totalorder %s264, %s266
      %p270 = scmp.eq.s32.totalorder %s29, 0
      %p271 = por %p269, %p270
      %p272 = scmp.ne.s32.totalorder %s264, %s266
      %p273 = scmp.eq.s32.totalorder %s34, 3
      %p274 = por %p272, %p273
      %p275 = scmp.ne.s32.totalorder %s266, %s267
      %p276 = scmp.eq.s32.totalorder %s34, 0
      %p277 = por %p275, %p276
      %p278 = scmp.ne.s32.totalorder %s266, %s267
      %p279 = scmp.eq.s32.totalorder %s35, 3
      %p280 = por %p278, %p279
      %p282 = scmp.ne.s32.totalorder %s267, %s281
      %p283 = scmp.eq.s32.totalorder %s35, 0
      %p284 = por %p282, %p283
      %s286 = sadd.s32 %s285, 1
      %p289 = scmp.eq.s32.totalorder %s29, 3
      %p290 = scmp.ne.s32.totalorder %s285, %s287
      %p291 = scmp.eq.s32.totalorder %s29, 0
      %p292 = por %p290, %p291
      %p293 = scmp.ne.s32.totalorder %s285, %s287
      %p294 = scmp.eq.s32.totalorder %s34, 3
      %p295 = por %p293, %p294
      %p296 = scmp.ne.s32.totalorder %s287, %s288
      %p297 = scmp.eq.s32.totalorder %s34, 0
      %p298 = por %p296, %p297
      %p299 = scmp.ne.s32.totalorder %s287, %s288
      %p300 = scmp.eq.s32.totalorder %s35, 3
      %p301 = por %p299, %p300
      %p303 = scmp.ne.s32.totalorder %s288, %s302
      %p304 = scmp.eq.s32.totalorder %s35, 0
      %p305 = por %p303, %p304
      %s307 = sadd.s32 %s306, 1
      %p310 = scmp.eq.s32.totalorder %s29, 3
      %p311 = scmp.ne.s32.totalorder %s306, %s308
      %p312 = scmp.eq.s32.totalorder %s29, 0
      %p313 = por %p311, %p312
      %p314 = scmp.ne.s32.totalorder %s306, %s308
      %p315 = scmp.eq.s32.totalorder %s34, 3
      %p316 = por %p314, %p315
      %p317 = scmp.ne.s32.totalorder %s308, %s309
      %p318 = scmp.eq.s32.totalorder %s34, 0
      %p319 = por %p317, %p318
      %p320 = scmp.ne.s32.totalorder %s308, %s309
      %p321 = scmp.eq.s32.totalorder %s35, 3
      %p322 = por %p320, %p321
      %p324 = scmp.ne.s32.totalorder %s309, %s323
      %p325 = scmp.eq.s32.totalorder %s35, 0
      %p326 = por %p324, %p325
      %s328 = sadd.s32 %s327, 1
      %p331 = scmp.eq.s32.totalorder %s29, 3
      %p332 = scmp.ne.s32.totalorder %s327, %s329
      %p333 = scmp.eq.s32.totalorder %s29, 0
      %p334 = por %p332, %p333
      %p335 = scmp.ne.s32.totalorder %s327, %s329
      %p336 = scmp.eq.s32.totalorder %s34, 3
      %p337 = por %p335, %p336
      %p338 = scmp.ne.s32.totalorder %s329, %s330
      %p339 = scmp.eq.s32.totalorder %s34, 0
      %p340 = por %p338, %p339
      %p341 = scmp.ne.s32.totalorder %s329, %s330
      %p342 = scmp.eq.s32.totalorder %s35, 3
      %p343 = por %p341, %p342
      %p345 = scmp.ne.s32.totalorder %s330, %s344
      %p346 = scmp.eq.s32.totalorder %s35, 0
      %p347 = por %p345, %p346
      %s349 = sadd.s32 %s348, 1
      %p352 = scmp.eq.s32.totalorder %s29, 3
      %p353 = scmp.ne.s32.totalorder %s348, %s350
      %p354 = scmp.eq.s32.totalorder %s29, 0
      %p355 = por %p353, %p354
      %p356 = scmp.ne.s32.totalorder %s348, %s350
      %p357 = scmp.eq.s32.totalorder %s34, 3
      %p358 = por %p356, %p357
      %p359 = scmp.ne.s32.totalorder %s350, %s351
      %p360 = scmp.eq.s32.totalorder %s34, 0
      %p361 = por %p359, %p360
      %p362 = scmp.ne.s32.totalorder %s350, %s351
      %p363 = scmp.eq.s32.totalorder %s35, 3
      %p364 = por %p362, %p363
      %p366 = scmp.ne.s32.totalorder %s351, %s365
      %p367 = scmp.eq.s32.totalorder %s35, 0
      %p368 = por %p366, %p367
      %s369 = ssub.s32 %s36, %s48
      %p370 = scmp.eq.s32.totalorder %s369, 0
      %s372 = sadd.s32 %s371, 1
      %s373 = scalar_select %p370, %s371, %s372
      %p376 = pneg %p370
      %p377 = scmp.eq.s32.totalorder %s29, 3
      %p378 = por %p376, %p377
      %p379 = scmp.ne.s32.totalorder %s371, %s374
      %p380 = scmp.eq.s32.totalorder %s29, 0
      %p381 = por %p379, %p380
      %p382 = scmp.ne.s32.totalorder %s371, %s374
      %p383 = scmp.eq.s32.totalorder %s34, 3
      %p384 = por %p382, %p383
      %p385 = scmp.ne.s32.totalorder %s374, %s375
      %p386 = scmp.eq.s32.totalorder %s34, 0
      %p387 = por %p385, %p386
      %p388 = scmp.ne.s32.totalorder %s374, %s375
      %p389 = scmp.eq.s32.totalorder %s35, 3
      %p390 = por %p388, %p389
      %p392 = scmp.ne.s32.totalorder %s375, %s391
      %p393 = scmp.eq.s32.totalorder %s35, 0
      %p394 = por %p392, %p393
      %p395 = scmp.le.s32.totalorder 1, %s29
      %p396 = scmp.lt.s32.totalorder %s29, 5
      %p397 = pnand %p395, %p396
      %p398 = pneg %p397
      // Predicated region
      $region9: #{tpu_custom_call.1} parent=5 // pred_check
        _
      $region10: #{tpu_custom_call.1} parent=5 // pred_check_branch
        %400 = sbr.rel (%p397) target = $region12
      $region11: #{tpu_custom_call.1} parent=5 // pred_region
        %s401 = ssub.s32 %s29, 1
        // Predicated region
        $region13: #{tpu_custom_call.1} parent=11 // pred_check
          %p402 = pneg %p88
        $region14: #{tpu_custom_call.1} parent=11 // pred_check_branch
          %404 = sbr.rel (%p402) target = $region16
        $region15: #{tpu_custom_call.1} parent=11 // pred_region
          %406 = vsyncadd [#allocation9], 0
          %s407 = sshll.u32 %s1, 4
          %s408 = int_to_ptr.hbm [resolvable:$true] %s407
          %s409 = sshll.u32 [#allocation8], 4
          %s410 = int_to_ptr.vmem [resolvable:$true] %s409
          %415 = dma.hbm_to_vmem [thread:$0]  %s408, 32, %s410, [#allocation9], 16, 16, 1
        $region16: #{tpu_custom_call.1} parent=11 // pred_fallthru
          _
        // Predicated region
        $region17: #{tpu_custom_call.1} parent=11 // pred_check
          %p416 = pneg %p109
        $region18: #{tpu_custom_call.1} parent=11 // pred_check_branch
          %418 = sbr.rel (%p416) target = $region20
        $region19: #{tpu_custom_call.1} parent=11 // pred_region
          %420 = vsyncadd [#allocation9], 0
          %s421 = sshll.u32 %s2, 4
          %s422 = int_to_ptr.hbm [resolvable:$true] %s421
          %s423 = sshll.u32 [#allocation10], 4
          %s424 = int_to_ptr.vmem [resolvable:$true] %s423
          %429 = dma.hbm_to_vmem [thread:$0]  %s422, 32, %s424, [#allocation9], 16, 16, 1
        $region20: #{tpu_custom_call.1} parent=11 // pred_fallthru
          _
        // Predicated region
        $region21: #{tpu_custom_call.1} parent=11 // pred_check
          %p430 = pneg %p130
        $region22: #{tpu_custom_call.1} parent=11 // pred_check_branch
          %432 = sbr.rel (%p430) target = $region24
        $region23: #{tpu_custom_call.1} parent=11 // pred_region
          _
        $region24: #{tpu_custom_call.1} parent=11 // pred_fallthru
          _
        // Predicated region
        $region25: #{tpu_custom_call.1} parent=11 // pred_check
          %p433 = pneg %p151
        $region26: #{tpu_custom_call.1} parent=11 // pred_check_branch
          %435 = sbr.rel (%p433) target = $region28
        $region27: #{tpu_custom_call.1} parent=11 // pred_region
          _
        $region28: #{tpu_custom_call.1} parent=11 // pred_fallthru
          _
        // Predicated region
        $region29: #{tpu_custom_call.1} parent=11 // pred_check
          %p436 = pneg %p172
        $region30: #{tpu_custom_call.1} parent=11 // pred_check_branch
          %438 = sbr.rel (%p436) target = $region32
        $region31: #{tpu_custom_call.1} parent=11 // pred_region
          _
        $region32: #{tpu_custom_call.1} parent=11 // pred_fallthru
          _
        // Predicated region
        $region33: #{tpu_custom_call.1} parent=11 // pred_check
          %p439 = pneg %p193
        $region34: #{tpu_custom_call.1} parent=11 // pred_check_branch
          %441 = sbr.rel (%p439) target = $region36
        $region35: #{tpu_custom_call.1} parent=11 // pred_region
          _
        $region36: #{tpu_custom_call.1} parent=11 // pred_fallthru
          _
        // Predicated region
        $region37: #{tpu_custom_call.1} parent=11 // pred_check
          %p442 = pneg %p214
        $region38: #{tpu_custom_call.1} parent=11 // pred_check_branch
          %444 = sbr.rel (%p442) target = $region40
        $region39: #{tpu_custom_call.1} parent=11 // pred_region
          %446 = vsyncadd [#allocation12], 0
          %s447 = sshll.u32 %s7, 4
          %s448 = int_to_ptr.hbm [resolvable:$true] %s447
          %s449 = sshll.u32 [#allocation11], 4
          %s450 = int_to_ptr.vmem [resolvable:$true] %s449
          %455 = dma.hbm_to_vmem [thread:$0]  %s448, 32, %s450, [#allocation12], 16, 16, 1
        $region40: #{tpu_custom_call.1} parent=11 // pred_fallthru
          _
        // Predicated region
        $region41: #{tpu_custom_call.1} parent=11 // pred_check
          %p456 = pneg %p235
        $region42: #{tpu_custom_call.1} parent=11 // pred_check_branch
          %458 = sbr.rel (%p456) target = $region44
        $region43: #{tpu_custom_call.1} parent=11 // pred_region
          _
        $region44: #{tpu_custom_call.1} parent=11 // pred_fallthru
          _
        // Predicated region
        $region45: #{tpu_custom_call.1} parent=11 // pred_check
          %p459 = pneg %p256
        $region46: #{tpu_custom_call.1} parent=11 // pred_check_branch
          %461 = sbr.rel (%p459) target = $region48
        $region47: #{tpu_custom_call.1} parent=11 // pred_region
          _
        $region48: #{tpu_custom_call.1} parent=11 // pred_fallthru
          _
        // Predicated region
        $region49: #{tpu_custom_call.1} parent=11 // pred_check
          %p462 = pneg %p277
        $region50: #{tpu_custom_call.1} parent=11 // pred_check_branch
          %464 = sbr.rel (%p462) target = $region52
        $region51: #{tpu_custom_call.1} parent=11 // pred_region
          _
        $region52: #{tpu_custom_call.1} parent=11 // pred_fallthru
          _
        // Predicated region
        $region53: #{tpu_custom_call.1} parent=11 // pred_check
          %p465 = pneg %p298
        $region54: #{tpu_custom_call.1} parent=11 // pred_check_branch
          %467 = sbr.rel (%p465) target = $region56
        $region55: #{tpu_custom_call.1} parent=11 // pred_region
          _
        $region56: #{tpu_custom_call.1} parent=11 // pred_fallthru
          _
        // Predicated region
        $region57: #{tpu_custom_call.1} parent=11 // pred_check
          %p468 = pneg %p319
        $region58: #{tpu_custom_call.1} parent=11 // pred_check_branch
          %470 = sbr.rel (%p468) target = $region60
        $region59: #{tpu_custom_call.1} parent=11 // pred_region
          _
        $region60: #{tpu_custom_call.1} parent=11 // pred_fallthru
          _
        // Predicated region
        $region61: #{tpu_custom_call.1} parent=11 // pred_check
          %p471 = pneg %p340
        $region62: #{tpu_custom_call.1} parent=11 // pred_check_branch
          %473 = sbr.rel (%p471) target = $region64
        $region63: #{tpu_custom_call.1} parent=11 // pred_region
          _
        $region64: #{tpu_custom_call.1} parent=11 // pred_fallthru
          _
        // Predicated region
        $region65: #{tpu_custom_call.1} parent=11 // pred_check
          %p474 = pneg %p361
        $region66: #{tpu_custom_call.1} parent=11 // pred_check_branch
          %476 = sbr.rel (%p474) target = $region68
        $region67: #{tpu_custom_call.1} parent=11 // pred_region
          _
        $region68: #{tpu_custom_call.1} parent=11 // pred_fallthru
          _
      $region12: #{tpu_custom_call.1} parent=5 // pred_fallthru
        _
      %p477 = scmp.lt.s32.totalorder %s29, 4
      // Predicated region
      $region69: #{tpu_custom_call.1} parent=5 // pred_check
        %p478 = pneg %p477
      $region70: #{tpu_custom_call.1} parent=5 // pred_check_branch
        %480 = sbr.rel (%p478) target = $region72
      $region71: #{tpu_custom_call.1} parent=5 // pred_region
        // Predicated region
        $region73: #{tpu_custom_call.1} parent=71 // pred_check
          %p481 = pneg %p61
        $region74: #{tpu_custom_call.1} parent=71 // pred_check_branch
          %483 = sbr.rel (%p481) target = $region76
        $region75: #{tpu_custom_call.1} parent=71 // pred_region
          %s484 = sand.u32 %s51, 1
          %s485 = scalar_lea.sflag [#allocation6], %s484
          %s486 = sand.u32 %s51, 1
          %s487 = smul.addr %s486, 8
          %s488 = scalar_lea.vmem [#allocation5], %s487
          %490 = vsyncadd %s485, 0
          %s491 = smul.addr %s36, 8
          %s492 = scalar_lea.hbm %s0, %s491
          %s494 = sshll.u32 %s492, 4
          %s495 = int_to_ptr.hbm [resolvable:$true] %s494
          %s496 = sshll.u32 %s488, 4
          %s497 = int_to_ptr.vmem [resolvable:$true] %s496
          %499 = dma.hbm_to_vmem [thread:$0]  %s495, 128, %s497, %s485
        $region76: #{tpu_custom_call.1} parent=71 // pred_fallthru
          _
      $region72: #{tpu_custom_call.1} parent=5 // pred_fallthru
        _
      %p500 = scmp.le.s32.totalorder 1, %s29
      %p501 = scmp.lt.s32.totalorder %s29, 5
      %p502 = pnand %p500, %p501
      %p503 = pneg %p502
      // Predicated region
      $region77: #{tpu_custom_call.1} parent=5 // pred_check
        _
      $region78: #{tpu_custom_call.1} parent=5 // pred_check_branch
        %505 = sbr.rel (%p502) target = $region80
      $region79: #{tpu_custom_call.1} parent=5 // pred_region
        %s506 = ssub.s32 %s29, 1
        %s507 = sand.u32 %s54, 1
        %s508 = scalar_lea.sflag [#allocation6], %s507
        %s509 = sand.u32 %s54, 1
        %s510 = smul.addr %s509, 8
        %s511 = scalar_lea.vmem [#allocation5], %s510
        // Predicated region
        $region81: #{tpu_custom_call.1} parent=79 // pred_check
          %p512 = pneg %p67
        $region82: #{tpu_custom_call.1} parent=79 // pred_check_branch
          %514 = sbr.rel (%p512) target = $region84
        $region83: #{tpu_custom_call.1} parent=79 // pred_region
          %516 = dma.done %s508, 128
        $region84: #{tpu_custom_call.1} parent=79 // pred_fallthru
          _
        // Predicated region
        $region85: #{tpu_custom_call.1} parent=79 // pred_check
          %p517 = pneg %p88
        $region86: #{tpu_custom_call.1} parent=79 // pred_check_branch
          %519 = sbr.rel (%p517) target = $region88
        $region87: #{tpu_custom_call.1} parent=79 // pred_region
          %521 = dma.done [#allocation9], 32
        $region88: #{tpu_custom_call.1} parent=79 // pred_fallthru
          _
        // Predicated region
        $region89: #{tpu_custom_call.1} parent=79 // pred_check
          %p522 = pneg %p109
        $region90: #{tpu_custom_call.1} parent=79 // pred_check_branch
          %524 = sbr.rel (%p522) target = $region92
        $region91: #{tpu_custom_call.1} parent=79 // pred_region
          %526 = dma.done [#allocation9], 32
        $region92: #{tpu_custom_call.1} parent=79 // pred_fallthru
          _
        // Predicated region
        $region93: #{tpu_custom_call.1} parent=79 // pred_check
          %p527 = pneg %p214
        $region94: #{tpu_custom_call.1} parent=79 // pred_check_branch
          %529 = sbr.rel (%p527) target = $region96
        $region95: #{tpu_custom_call.1} parent=79 // pred_region
          %531 = dma.done [#allocation12], 32
        $region96: #{tpu_custom_call.1} parent=79 // pred_fallthru
          _
        %s532 = sand.u32 %s54, 1
        %s533 = scalar_lea.sflag [#allocation6], %s532
        %s534 = sand.u32 %s54, 1
        %s535 = smul.addr %s534, 8
        %s536 = scalar_lea.vmem [#allocation5], %s535
        %p537 = pneg %p67
        %p538 = pneg %p64
        %p539 = pneg %p88
        %p540 = pneg %p85
        %p541 = pneg %p109
        %p542 = pneg %p106
        %p543 = pneg %p130
        %p544 = pneg %p127
        %p545 = pneg %p151
        %p546 = pneg %p148
        %p547 = pneg %p172
        %p548 = pneg %p169
        %p549 = pneg %p193
        %p550 = pneg %p190
        %p551 = pneg %p214
        %p552 = pneg %p211
        %p553 = pneg %p235
        %p554 = pneg %p232
        %p555 = pneg %p256
        %p556 = pneg %p253
        %p557 = pneg %p277
        %p558 = pneg %p274
        %p559 = pneg %p298
        %p560 = pneg %p295
        %p561 = pneg %p319
        %p562 = pneg %p316
        %p563 = pneg %p340
        %p564 = pneg %p337
        %p565 = pneg %p361
        %p566 = pneg %p358
        %p567 = pneg %p387
        %p568 = pneg %p384
        %s569 = sand.u32 %s374, 1
        %s570 = scalar_lea.sflag [#allocation7], %s569
        %s571 = sand.u32 %s374, 1
        %s572 = smul.addr %s571, 8
        %s573 = scalar_lea.vmem [#allocation13], %s572
        %p575 = scmp.eq.s32.totalorder %s39, 0
        // Predicated region
        $region97: #{tpu_custom_call.1} parent=79 // pred_check
          %p576 = pneg %p575
        $region98: #{tpu_custom_call.1} parent=79 // pred_check_branch
          %578 = sbr.rel (%p576) target = $region100
        $region99: #{tpu_custom_call.1} parent=79 // pred_region
          %v579 = vld [vmem:[%s511] sm:$0xff]
          %vm580 = vcmask 261120
          %581 = vst.msk [vmem:[#allocation2] sm:$0xff] %vm580, %v579
        $region100: #{tpu_custom_call.1} parent=79 // pred_fallthru
          _
        %v582 = vld [vmem:[#allocation2] sm:$0xff]
        %s583 = scalar_lea.vmem [#allocation8], %s39
        %v584 = vld [vmem:[%s583] sm:$0x1]
        %s585 = scalar_lea.vmem [#allocation10], %s39
        %v586 = vld [vmem:[%s585] sm:$0x1]
        %vm587 = vcmask 261120
        %v588 = vsel %vm587, %v582, 0.0
        %589 = vadd.xlane.f32.xlu0 %v588
        %v590 = vpop.xlane.xlu0 %589
        %v591 = vrcp.pop 32.0
        %v592 = vmul.f32 32.0, %v591
        %v593 = vsub.f32 1.0, %v592
        %v594 = vmul.f32 %v591, %v593
        %v595 = vadd.f32 %v591, %v594
        %vm596 = vweird.f32 %v591
        %v597 = vsel %vm596, %v591, %v595
        %v598 = vmul.f32 %v590, %v597
        %v599 = vsub.f32 %v582, %v598
        %v600 = vmul.f32 %v599, %v599
        %v601 = vsel %vm587, %v600, 0.0
        %602 = vadd.xlane.f32.xlu0 %v601
        %v603 = vpop.xlane.xlu0 %602
        %v604 = vmul.f32 %v603, %v597
        %v605 = vadd.f32 %v604, 1e-05
        %v606 = vrsqrt.pop %v605
        %v607 = vmul.f32 %v606, %v605
        %v608 = vmul.f32 %v607, %v606
        %v609 = vmul.f32 0.5, %v608
        %v610 = vsub.f32 1.5, %v609
        %v611 = vmul.f32 %v606, %v610
        %vm612 = vweird.f32 %v605
        %vm613 = vweird.f32 %v606
        %vm614 = vmor %vm612, %vm613
        %v615 = vsel %vm614, %v606, %v611
        %v616 = vmul.f32 %v599, %v615
        %v618 = vperm.slane %v584, 0
        %v620 = vmul.f32 %v616, %v618
        %v622 = vperm.slane %v586, 0
        %v624 = vadd.f32 %v620, %v622
        %v625 = vpack.c.bf16 %v624, %v624
        %s626 = smul.u32 %s39, 4
        %s627 = smul.addr %s626, 4
        %s628 = scalar_lea.vmem %s3, %s627
        %v629 = vld [vmem:[%s628] sm:$0xf]
        %v630 = vld [vmem:[%s628 + $0x4] sm:$0xf]
        %v631 = vld [vmem:[%s628 + $0x8] sm:$0xf]
        %v632 = vld [vmem:[%s628 + $0xc] sm:$0xf]
        %s633 = scalar_lea.vmem %s4, %s39
        %v634 = vld [vmem:[%s633] sm:$0x1]
        %v636 = vperm.slane %v634, 0
        %v642 = vunpack.c.l.b16 %v629
        %v643 = vunpack.c.l.b16 %v630
        %v644 = vunpack.c.l.b16 %v631
        %v645 = vunpack.c.l.b16 %v632
        %v646 = vpack.c.b16 %v643, %v642
        %v647 = vpack.c.b16 %v645, %v644
        %v651 = vsel %vm587, %v625, 0
        %653 = vmatpush.bf16.msra.mxu0 0
        %654 = vmatpush.bf16.msra.mxu0 0
        %655 = vmatpush.bf16.msra.mxu0 0
        %656 = vmatpush.bf16.msra.mxu0 0
        %657 = vmatpush.bf16.msra.mxu0 0
        %658 = vmatpush.bf16.msra.mxu0 0
        %659 = vmatpush.bf16.msra.mxu0 %v647
        %660 = vmatpush.bf16.msra.mxu0 %v646
        %661 = vmatmul.bf16.gmra.mxu0 %v651
        %v662 = vpop.f32.mrf.mxu0
        %v663 = vadd.f32 %v636, %v662
        %v664 = vpop.f32.mrf.mxu0
        %665 = vdwg.mxu0
        %v666 = vpack.c.bf16 %v663, %v663
        %vm667 = vcmask 781312
        %668 = vst.msk [vmem:[#allocation3] sm:$0xf] %vm667, %v666
        %v669 = vld [vmem:[#allocation3] sm:$0xf]
        %v671 = vunpack.c.l.b16 %v669
        %v672 = vpack.c.b16 %v671, %v671
        %673 = vrot.lane.b32.xlu0 %v672, 96
        %v674 = vpop.permute.xlu0 %673
        %vm675 = vcmask 64512
        %v677 = vsel %vm675, %v669, 0
        %v680 = vsel %vm675, %v674, 0
        %682 = vmatpush.bf16.xpose.msra.mxu0 0
        %683 = vmatpush.bf16.xpose.msra.mxu0 0
        %684 = vmatpush.bf16.xpose.msra.mxu0 0
        %685 = vmatpush.bf16.xpose.msra.mxu0 0
        %686 = vmatpush.bf16.xpose.msra.mxu0 0
        %687 = vmatpush.bf16.xpose.msra.mxu0 0
        %688 = vmatpush.bf16.xpose.msra.mxu0 0
        %689 = vmatpush.bf16.xpose.msra.mxu0 %v680
        %690 = vmatmul.bf16.gmra.mxu0 %v677
        %v691 = vpop.f32.mrf.mxu0
        %v692 = vadd.f32 0.0, %v691
        %v693 = vpop.f32.mrf.mxu0
        %694 = vdwg.mxu0
        %v695 = vmul.f32 %v692, 0.35355338
        %v696 = vsel %vm675, %v695, -inf
        %697 = vmax.xlane.f32.xlu0 %v696
        %v698 = vpop.xlane.xlu0 %697
        %v699 = vsub.f32 %v695, %v698
        %v700 = vmul.f32 %v699, 1.442695
        %v701 = vpow.pop %v700
        %v702 = vsel %vm675, %v701, 0.0
        %703 = vadd.xlane.f32.xlu0 %v702
        %v704 = vpop.xlane.xlu0 %703
        %v705 = vrcp.pop %v704
        %v706 = vpack.c.bf16 %v701, %v701
        %707 = vrot.lane.b32.xlu0 %v672, 64
        %v708 = vpop.permute.xlu0 %707
        %v710 = vsel %vm675, %v706, 0
        %vm712 = vcmask 1043456
        %v714 = vsel %vm712, %v708, 0
        %716 = vmatpush.bf16.msra.mxu0 0
        %717 = vmatpush.bf16.msra.mxu0 0
        %718 = vmatpush.bf16.msra.mxu0 0
        %719 = vmatpush.bf16.msra.mxu0 0
        %720 = vmatpush.bf16.msra.mxu0 0
        %721 = vmatpush.bf16.msra.mxu0 0
        %722 = vmatpush.bf16.msra.mxu0 0
        %723 = vmatpush.bf16.msra.mxu0 %v714
        %724 = vmatmul.bf16.gmra.mxu0 %v710
        %v725 = vpop.f32.mrf.mxu0
        %v726 = vadd.f32 0.0, %v725
        %v727 = vpop.f32.mrf.mxu0
        %728 = vdwg.mxu0
        %v729 = vmul.f32 %v726, %v705
        %v730 = vpack.c.bf16 %v729, %v729
        %vm731 = vcmask 60416
        %732 = vst.msk [vmem:[#allocation4] sm:$0xf] %vm731, %v730
        %v733 = vld [vmem:[#allocation3] sm:$0xf]
        %v735 = vunpack.c.l.b16 %v733
        %v736 = vpack.c.b16 %v735, %v735
        %737 = vrot.lane.b32.xlu0 %v736, 120
        %v738 = vpop.permute.xlu0 %737
        %739 = vrot.lane.b32.xlu0 %v736, 88
        %v740 = vpop.permute.xlu0 %739
        %v742 = vsel %vm675, %v738, 0
        %v745 = vsel %vm675, %v740, 0
        %747 = vmatpush.bf16.xpose.msra.mxu0 0
        %748 = vmatpush.bf16.xpose.msra.mxu0 0
        %749 = vmatpush.bf16.xpose.msra.mxu0 0
        %750 = vmatpush.bf16.xpose.msra.mxu0 0
        %751 = vmatpush.bf16.xpose.msra.mxu0 0
        %752 = vmatpush.bf16.xpose.msra.mxu0 0
        %753 = vmatpush.bf16.xpose.msra.mxu0 0
        %754 = vmatpush.bf16.xpose.msra.mxu0 %v745
        %755 = vmatmul.bf16.gmra.mxu0 %v742
        %v756 = vpop.f32.mrf.mxu0
        %v757 = vadd.f32 0.0, %v756
        %v758 = vpop.f32.mrf.mxu0
        %759 = vdwg.mxu0
        %v760 = vmul.f32 %v757, 0.35355338
        %v761 = vsel %vm675, %v760, -inf
        %762 = vmax.xlane.f32.xlu0 %v761
        %v763 = vpop.xlane.xlu0 %762
        %v764 = vsub.f32 %v760, %v763
        %v765 = vmul.f32 %v764, 1.442695
        %v766 = vpow.pop %v765
        %v767 = vsel %vm675, %v766, 0.0
        %768 = vadd.xlane.f32.xlu0 %v767
        %v769 = vpop.xlane.xlu0 %768
        %v770 = vrcp.pop %v769
        %v771 = vpack.c.bf16 %v766, %v766
        %772 = vrot.lane.b32.xlu0 %v736, 56
        %v773 = vpop.permute.xlu0 %772
        %v775 = vsel %vm675, %v771, 0
        %v778 = vsel %vm712, %v773, 0
        %780 = vmatpush.bf16.msra.mxu0 0
        %781 = vmatpush.bf16.msra.mxu0 0
        %782 = vmatpush.bf16.msra.mxu0 0
        %783 = vmatpush.bf16.msra.mxu0 0
        %784 = vmatpush.bf16.msra.mxu0 0
        %785 = vmatpush.bf16.msra.mxu0 0
        %786 = vmatpush.bf16.msra.mxu0 0
        %787 = vmatpush.bf16.msra.mxu0 %v778
        %788 = vmatmul.bf16.gmra.mxu0 %v775
        %v789 = vpop.f32.mrf.mxu0
        %v790 = vadd.f32 0.0, %v789
        %v791 = vpop.f32.mrf.mxu0
        %792 = vdwg.mxu0
        %v793 = vmul.f32 %v790, %v770
        %v794 = vpack.c.bf16 %v793, %v793
        %796 = vrot.lane.b32.xlu0 %v794, 8
        %v797 = vpop.permute.xlu0 %796
        %vm799 = vcmask 126016
        %800 = vst.msk [vmem:[#allocation4] sm:$0xf] %vm799, %v797
        %v801 = vld [vmem:[#allocation3] sm:$0xf]
        %v803 = vunpack.c.l.b16 %v801
        %v804 = vpack.c.b16 %v803, %v803
        %805 = vrot.lane.b32.xlu0 %v804, 112
        %v806 = vpop.permute.xlu0 %805
        %807 = vrot.lane.b32.xlu0 %v804, 80
        %v808 = vpop.permute.xlu0 %807
        %v810 = vsel %vm675, %v806, 0
        %v813 = vsel %vm675, %v808, 0
        %815 = vmatpush.bf16.xpose.msra.mxu0 0
        %816 = vmatpush.bf16.xpose.msra.mxu0 0
        %817 = vmatpush.bf16.xpose.msra.mxu0 0
        %818 = vmatpush.bf16.xpose.msra.mxu0 0
        %819 = vmatpush.bf16.xpose.msra.mxu0 0
        %820 = vmatpush.bf16.xpose.msra.mxu0 0
        %821 = vmatpush.bf16.xpose.msra.mxu0 0
        %822 = vmatpush.bf16.xpose.msra.mxu0 %v813
        %823 = vmatmul.bf16.gmra.mxu0 %v810
        %v824 = vpop.f32.mrf.mxu0
        %v825 = vadd.f32 0.0, %v824
        %v826 = vpop.f32.mrf.mxu0
        %827 = vdwg.mxu0
        %v828 = vmul.f32 %v825, 0.35355338
        %v829 = vsel %vm675, %v828, -inf
        %830 = vmax.xlane.f32.xlu0 %v829
        %v831 = vpop.xlane.xlu0 %830
        %v832 = vsub.f32 %v828, %v831
        %v833 = vmul.f32 %v832, 1.442695
        %v834 = vpow.pop %v833
        %v835 = vsel %vm675, %v834, 0.0
        %836 = vadd.xlane.f32.xlu0 %v835
        %v837 = vpop.xlane.xlu0 %836
        %v838 = vrcp.pop %v837
        %v839 = vpack.c.bf16 %v834, %v834
        %840 = vrot.lane.b32.xlu0 %v804, 48
        %v841 = vpop.permute.xlu0 %840
        %v843 = vsel %vm675, %v839, 0
        %v846 = vsel %vm712, %v841, 0
        %848 = vmatpush.bf16.msra.mxu0 0
        %849 = vmatpush.bf16.msra.mxu0 0
        %850 = vmatpush.bf16.msra.mxu0 0
        %851 = vmatpush.bf16.msra.mxu0 0
        %852 = vmatpush.bf16.msra.mxu0 0
        %853 = vmatpush.bf16.msra.mxu0 0
        %854 = vmatpush.bf16.msra.mxu0 0
        %855 = vmatpush.bf16.msra.mxu0 %v846
        %856 = vmatmul.bf16.gmra.mxu0 %v843
        %v857 = vpop.f32.mrf.mxu0
        %v858 = vadd.f32 0.0, %v857
        %v859 = vpop.f32.mrf.mxu0
        %860 = vdwg.mxu0
        %v861 = vmul.f32 %v858, %v838
        %v862 = vpack.c.bf16 %v861, %v861
        %864 = vrot.lane.b32.xlu0 %v862, 16
        %v865 = vpop.permute.xlu0 %864
        %vm867 = vcmask 191616
        %868 = vst.msk [vmem:[#allocation4] sm:$0xf] %vm867, %v865
        %v869 = vld [vmem:[#allocation3] sm:$0xf]
        %v871 = vunpack.c.l.b16 %v869
        %v872 = vpack.c.b16 %v871, %v871
        %873 = vrot.lane.b32.xlu0 %v872, 104
        %v874 = vpop.permute.xlu0 %873
        %875 = vrot.lane.b32.xlu0 %v872, 72
        %v876 = vpop.permute.xlu0 %875
        %v878 = vsel %vm675, %v874, 0
        %v881 = vsel %vm675, %v876, 0
        %883 = vmatpush.bf16.xpose.msra.mxu0 0
        %884 = vmatpush.bf16.xpose.msra.mxu0 0
        %885 = vmatpush.bf16.xpose.msra.mxu0 0
        %886 = vmatpush.bf16.xpose.msra.mxu0 0
        %887 = vmatpush.bf16.xpose.msra.mxu0 0
        %888 = vmatpush.bf16.xpose.msra.mxu0 0
        %889 = vmatpush.bf16.xpose.msra.mxu0 0
        %890 = vmatpush.bf16.xpose.msra.mxu0 %v881
        %891 = vmatmul.bf16.gmra.mxu0 %v878
        %v892 = vpop.f32.mrf.mxu0
        %v893 = vadd.f32 0.0, %v892
        %v894 = vpop.f32.mrf.mxu0
        %895 = vdwg.mxu0
        %v896 = vmul.f32 %v893, 0.35355338
        %v897 = vsel %vm675, %v896, -inf
        %898 = vmax.xlane.f32.xlu0 %v897
        %v899 = vpop.xlane.xlu0 %898
        %v900 = vsub.f32 %v896, %v899
        %v901 = vmul.f32 %v900, 1.442695
        %v902 = vpow.pop %v901
        %v903 = vsel %vm675, %v902, 0.0
        %904 = vadd.xlane.f32.xlu0 %v903
        %v905 = vpop.xlane.xlu0 %904
        %v906 = vrcp.pop %v905
        %v907 = vpack.c.bf16 %v902, %v902
        %908 = vrot.lane.b32.xlu0 %v872, 40
        %v909 = vpop.permute.xlu0 %908
        %v911 = vsel %vm675, %v907, 0
        %v914 = vsel %vm712, %v909, 0
        %916 = vmatpush.bf16.msra.mxu0 0
        %917 = vmatpush.bf16.msra.mxu0 0
        %918 = vmatpush.bf16.msra.mxu0 0
        %919 = vmatpush.bf16.msra.mxu0 0
        %920 = vmatpush.bf16.msra.mxu0 0
        %921 = vmatpush.bf16.msra.mxu0 0
        %922 = vmatpush.bf16.msra.mxu0 0
        %923 = vmatpush.bf16.msra.mxu0 %v914
        %924 = vmatmul.bf16.gmra.mxu0 %v911
        %v925 = vpop.f32.mrf.mxu0
        %v926 = vadd.f32 0.0, %v925
        %v927 = vpop.f32.mrf.mxu0
        %928 = vdwg.mxu0
        %v929 = vmul.f32 %v926, %v906
        %v930 = vpack.c.bf16 %v929, %v929
        %932 = vrot.lane.b32.xlu0 %v930, 24
        %v933 = vpop.permute.xlu0 %932
        %vm935 = vcmask 257216
        %936 = vst.msk [vmem:[#allocation4] sm:$0xf] %vm935, %v933
        %v937 = vld [vmem:[#allocation4] sm:$0xf]
        %s938 = smul.addr %s626, 4
        %s939 = scalar_lea.vmem %s5, %s938
        %v940 = vld [vmem:[%s939] sm:$0xf]
        %v941 = vld [vmem:[%s939 + $0x4] sm:$0xf]
        %v942 = vld [vmem:[%s939 + $0x8] sm:$0xf]
        %v943 = vld [vmem:[%s939 + $0xc] sm:$0xf]
        %s944 = scalar_lea.vmem %s6, %s39
        %v945 = vld [vmem:[%s944] sm:$0x1]
        %v947 = vperm.slane %v945, 0
        %v953 = vunpack.c.l.b16 %v940
        %v954 = vunpack.c.l.b16 %v941
        %v955 = vunpack.c.l.b16 %v942
        %v956 = vunpack.c.l.b16 %v943
        %v957 = vpack.c.b16 %v954, %v953
        %v958 = vpack.c.b16 %v956, %v955
        %v962 = vsel %vm587, %v937, 0
        %964 = vmatpush.bf16.msra.mxu0 0
        %965 = vmatpush.bf16.msra.mxu0 0
        %966 = vmatpush.bf16.msra.mxu0 0
        %967 = vmatpush.bf16.msra.mxu0 0
        %968 = vmatpush.bf16.msra.mxu0 0
        %969 = vmatpush.bf16.msra.mxu0 0
        %970 = vmatpush.bf16.msra.mxu0 %v958
        %971 = vmatpush.bf16.msra.mxu0 %v957
        %972 = vmatmul.bf16.gmra.mxu0 %v962
        %v973 = vpop.f32.mrf.mxu0
        %v974 = vadd.f32 %v947, %v973
        %v975 = vpop.f32.mrf.mxu0
        %976 = vdwg.mxu0
        %v977 = vadd.f32 %v582, %v974
        %s978 = scalar_lea.vmem [#allocation11], %s39
        %v979 = vld [vmem:[%s978] sm:$0x1]
        %s980 = scalar_lea.vmem %s8, %s39
        %v981 = vld [vmem:[%s980] sm:$0x1]
        %v982 = vsel %vm587, %v977, 0.0
        %983 = vadd.xlane.f32.xlu0 %v982
        %v984 = vpop.xlane.xlu0 %983
        %v985 = vmul.f32 %v984, %v597
        %v986 = vsub.f32 %v977, %v985
        %v987 = vmul.f32 %v986, %v986
        %v988 = vsel %vm587, %v987, 0.0
        %989 = vadd.xlane.f32.xlu0 %v988
        %v990 = vpop.xlane.xlu0 %989
        %v991 = vmul.f32 %v990, %v597
        %v992 = vadd.f32 %v991, 1e-05
        %v993 = vrsqrt.pop %v992
        %v994 = vmul.f32 %v993, %v992
        %v995 = vmul.f32 %v994, %v993
        %v996 = vmul.f32 0.5, %v995
        %v997 = vsub.f32 1.5, %v996
        %v998 = vmul.f32 %v993, %v997
        %vm999 = vweird.f32 %v992
        %vm1000 = vweird.f32 %v993
        %vm1001 = vmor %vm999, %vm1000
        %v1002 = vsel %vm1001, %v993, %v998
        %v1003 = vmul.f32 %v986, %v1002
        %v1005 = vperm.slane %v979, 0
        %v1007 = vmul.f32 %v1003, %v1005
        %v1009 = vperm.slane %v981, 0
        %v1011 = vadd.f32 %v1007, %v1009
        %v1012 = vpack.c.bf16 %v1011, %v1011
        %s1013 = smul.addr %s626, 4
        %s1014 = scalar_lea.vmem %s9, %s1013
        %v1015 = vld [vmem:[%s1014] sm:$0xf]
        %v1016 = vld [vmem:[%s1014 + $0x4] sm:$0xf]
        %v1017 = vld [vmem:[%s1014 + $0x8] sm:$0xf]
        %v1018 = vld [vmem:[%s1014 + $0xc] sm:$0xf]
        %s1019 = scalar_lea.vmem %s10, %s39
        %v1020 = vld [vmem:[%s1019] sm:$0x1]
        %v1022 = vperm.slane %v1020, 0
        %v1028 = vunpack.c.l.b16 %v1015
        %v1029 = vunpack.c.l.b16 %v1016
        %v1030 = vunpack.c.l.b16 %v1017
        %v1031 = vunpack.c.l.b16 %v1018
        %v1032 = vpack.c.b16 %v1029, %v1028
        %v1033 = vpack.c.b16 %v1031, %v1030
        %v1037 = vsel %vm587, %v1012, 0
        %1039 = vmatpush.bf16.msra.mxu0 0
        %1040 = vmatpush.bf16.msra.mxu0 0
        %1041 = vmatpush.bf16.msra.mxu0 0
        %1042 = vmatpush.bf16.msra.mxu0 0
        %1043 = vmatpush.bf16.msra.mxu0 0
        %1044 = vmatpush.bf16.msra.mxu0 0
        %1045 = vmatpush.bf16.msra.mxu0 %v1033
        %1046 = vmatpush.bf16.msra.mxu0 %v1032
        %1047 = vmatmul.bf16.gmra.mxu0 %v1037
        %v1048 = vpop.f32.mrf.mxu0
        %v1049 = vadd.f32 %v1022, %v1048
        %v1050 = vpop.f32.mrf.mxu0
        %1051 = vdwg.mxu0
        %v1052 = vmax.f32 %v1049, 0.0
        %v1053 = vpack.c.bf16 %v1052, %v1052
        %s1054 = smul.u32 %s39, 8
        %s1055 = smul.addr %s1054, 4
        %s1056 = scalar_lea.vmem %s11, %s1055
        %v1057 = vld [vmem:[%s1056] sm:$0xf]
        %v1058 = vld [vmem:[%s1056 + $0x4] sm:$0xf]
        %v1059 = vld [vmem:[%s1056 + $0x8] sm:$0xf]
        %v1060 = vld [vmem:[%s1056 + $0xc] sm:$0xf]
        %v1061 = vld [vmem:[%s1056 + $0x10] sm:$0xf]
        %v1062 = vld [vmem:[%s1056 + $0x14] sm:$0xf]
        %v1063 = vld [vmem:[%s1056 + $0x18] sm:$0xf]
        %v1064 = vld [vmem:[%s1056 + $0x1c] sm:$0xf]
        %s1065 = scalar_lea.vmem %s12, %s39
        %v1066 = vld [vmem:[%s1065] sm:$0x1]
        %v1068 = vperm.slane %v1066, 0
        %v1078 = vunpack.c.l.b16 %v1057
        %v1079 = vunpack.c.l.b16 %v1058
        %v1080 = vunpack.c.l.b16 %v1059
        %v1081 = vunpack.c.l.b16 %v1060
        %v1082 = vunpack.c.l.b16 %v1061
        %v1083 = vunpack.c.l.b16 %v1062
        %v1084 = vunpack.c.l.b16 %v1063
        %v1085 = vunpack.c.l.b16 %v1064
        %v1086 = vpack.c.b16 %v1079, %v1078
        %v1087 = vpack.c.b16 %v1081, %v1080
        %v1088 = vpack.c.b16 %v1083, %v1082
        %v1089 = vpack.c.b16 %v1085, %v1084
        %vm1094 = vcmask 523264
        %v1096 = vsel %vm1094, %v1053, 0
        %1098 = vmatpush.bf16.msra.mxu0 0
        %1099 = vmatpush.bf16.msra.mxu0 0
        %1100 = vmatpush.bf16.msra.mxu0 0
        %1101 = vmatpush.bf16.msra.mxu0 0
        %1102 = vmatpush.bf16.msra.mxu0 %v1089
        %1103 = vmatpush.bf16.msra.mxu0 %v1088
        %1104 = vmatpush.bf16.msra.mxu0 %v1087
        %1105 = vmatpush.bf16.msra.mxu0 %v1086
        %1106 = vmatmul.bf16.gmra.mxu0 %v1096
        %v1107 = vpop.f32.mrf.mxu0
        %v1108 = vadd.f32 %v1068, %v1107
        %v1109 = vpop.f32.mrf.mxu0
        %1110 = vdwg.mxu0
        %v1111 = vadd.f32 %v977, %v1108
        %1112 = vst.msk [vmem:[#allocation2] sm:$0xff] %vm587, %v1111
        %p1113 = scmp.eq.s32.totalorder %s39, 1
        // Predicated region
        $region101: #{tpu_custom_call.1} parent=79 // pred_check
          %p1114 = pneg %p1113
        $region102: #{tpu_custom_call.1} parent=79 // pred_check_branch
          %1116 = sbr.rel (%p1114) target = $region104
        $region103: #{tpu_custom_call.1} parent=79 // pred_region
          %v1117 = vld [vmem:[%s13] sm:$0x1]
          %v1118 = vld [vmem:[%s14] sm:$0x1]
          %v1119 = vsel %vm587, %v1111, 0.0
          %1120 = vadd.xlane.f32.xlu0 %v1119
          %v1121 = vpop.xlane.xlu0 %1120
          %v1122 = vmul.f32 %v1121, %v597
          %v1123 = vsub.f32 %v1111, %v1122
          %v1124 = vmul.f32 %v1123, %v1123
          %v1125 = vsel %vm587, %v1124, 0.0
          %1126 = vadd.xlane.f32.xlu0 %v1125
          %v1127 = vpop.xlane.xlu0 %1126
          %v1128 = vmul.f32 %v1127, %v597
          %v1129 = vadd.f32 %v1128, 1e-05
          %v1130 = vrsqrt.pop %v1129
          %v1131 = vmul.f32 %v1130, %v1129
          %v1132 = vmul.f32 %v1131, %v1130
          %v1133 = vmul.f32 0.5, %v1132
          %v1134 = vsub.f32 1.5, %v1133
          %v1135 = vmul.f32 %v1130, %v1134
          %vm1136 = vweird.f32 %v1129
          %vm1137 = vweird.f32 %v1130
          %vm1138 = vmor %vm1136, %vm1137
          %v1139 = vsel %vm1138, %v1130, %v1135
          %v1140 = vmul.f32 %v1123, %v1139
          %v1142 = vperm.slane %v1117, 0
          %v1144 = vmul.f32 %v1140, %v1142
          %v1146 = vperm.slane %v1118, 0
          %v1148 = vadd.f32 %v1144, %v1146
          %1149 = vst.msk [vmem:[%s573] sm:$0xff] %vm587, %v1148
        $region104: #{tpu_custom_call.1} parent=79 // pred_fallthru
          _
        %s1150 = sand.u32 %s374, 1
        %s1151 = scalar_lea.sflag [#allocation7], %s1150
        %s1152 = sand.u32 %s374, 1
        %s1153 = smul.addr %s1152, 8
        %s1154 = scalar_lea.vmem [#allocation13], %s1153
        // Predicated region
        $region105: #{tpu_custom_call.1} parent=79 // pred_check
          %p1155 = pneg %p384
        $region106: #{tpu_custom_call.1} parent=79 // pred_check_branch
          %1157 = sbr.rel (%p1155) target = $region108
        $region107: #{tpu_custom_call.1} parent=79 // pred_region
          %1159 = vsyncadd %s1151, 0
          %s1160 = smul.addr %s38, 8
          %s1161 = scalar_lea.hbm %s15, %s1160
          %s1163 = sshll.u32 %s1154, 4
          %s1164 = int_to_ptr.vmem [resolvable:$true] %s1163
          %s1165 = sshll.u32 %s1161, 4
          %s1166 = int_to_ptr.hbm [resolvable:$true] %s1165
          %1168 = dma.vmem_to_hbm [thread:$0]  %s1164, 128, %s1166, %s1151
        $region108: #{tpu_custom_call.1} parent=79 // pred_fallthru
          _
      $region80: #{tpu_custom_call.1} parent=5 // pred_fallthru
        _
      %p1169 = scmp.le.s32.totalorder 2, %s29
      // Predicated region
      $region109: #{tpu_custom_call.1} parent=5 // pred_check
        %p1170 = pneg %p1169
      $region110: #{tpu_custom_call.1} parent=5 // pred_check_branch
        %1172 = sbr.rel (%p1170) target = $region112
      $region111: #{tpu_custom_call.1} parent=5 // pred_region
        %s1173 = ssub.s32 %s29, 2
        // Predicated region
        $region113: #{tpu_custom_call.1} parent=111 // pred_check
          %p1174 = pneg %p390
        $region114: #{tpu_custom_call.1} parent=111 // pred_check_branch
          %1176 = sbr.rel (%p1174) target = $region116
        $region115: #{tpu_custom_call.1} parent=111 // pred_region
          %s1177 = sand.u32 %s375, 1
          %s1178 = scalar_lea.sflag [#allocation7], %s1177
          %s1179 = sand.u32 %s375, 1
          %s1180 = smul.addr %s1179, 8
          %s1181 = scalar_lea.vmem [#allocation13], %s1180
          %1183 = dma.done %s1178, 128
        $region116: #{tpu_custom_call.1} parent=111 // pred_fallthru
          _
      $region112: #{tpu_custom_call.1} parent=5 // pred_fallthru
        _
    $region6: #{tpu_custom_call.1} parent=1 // loop_footer
      %s33 = sadd.s32 1, %s29
    $region7: #{tpu_custom_call.1} parent=1 // loop_footer_branch
      %28 = sbr.rel target = $region3
    $region8: #{tpu_custom_call.1} parent=1 // loop_exit
      _
    %1184 = vsyncpa [#allocation6], 1
    %s1185 = scalar_lea.sflag [#allocation6], 1
    %1186 = vsyncpa %s1185, 1
    %1187 = vsyncpa [#allocation9], 1
    %1188 = vsyncpa [#allocation12], 1
    %1189 = vsyncpa [#allocation7], 1
    %s1190 = scalar_lea.sflag [#allocation7], 1
    %1191 = vsyncpa %s1190, 1

</llo_original>
